<compile_context>
chip_gen: v7x
topology: tpu7x:2x2x1
jax: 0.10.0
libtpu: 0.0.40
codegen_flags: <defaults>
</compile_context>

<pallas_src>
import jax
import jax.numpy as jnp
from jax.experimental import pallas as pl
from jax.experimental.pallas import tpu as pltpu


# ------------------------------ small helpers -------------------------------- #

def _rup(x, m):
    return (x + m - 1) // m * m


def _vmem_capacity_bytes():
    """Per-core VMEM capacity; conservative 64 MiB (v7x) if the query is unavailable."""
    try:
        info = pltpu.get_tpu_info()
        for attr in ("vmem_capacity_bytes", "vmem_size_bytes", "vmem_bytes"):
            cap = getattr(info, attr, None)
            if cap:
                return int(cap)
    except Exception:
        pass
    return 64 * 2**20


def _pick_row_tile(Ho, W, hidden_p, stride, budget_bytes=6 << 20):
    """Largest output-row tile whose hidden scratch fits the budget, preferring >=2
    grid steps along the row axis so the pipeline actually has something to overlap."""
    def scratch_bytes(t):
        return ((t - 1) * stride + 3) * (W + 16) * hidden_p * 4
    fitting = [t for t in range(1, Ho + 1)
               if Ho % t == 0 and scratch_bytes(t) <= budget_bytes]
    if not fitting:
        return 1
    multi = [t for t in fitting if Ho // t >= 2]
    return max(multi) if multi else max(fitting)


_ROLL_MODE = None


def _probe_roll_mode():
    """Empirically determine pltpu.roll's sublane-shift direction (and that it lowers)
    with a tiny probe kernel; fall back to plain ref slices if roll is unavailable."""
    global _ROLL_MODE
    if _ROLL_MODE is not None:
        return _ROLL_MODE
    try:
        def probe(x_ref, o_ref):
            o_ref[...] = pltpu.roll(x_ref[...], shift=1, axis=1)

        x = jnp.arange(8, dtype=jnp.float32)[None, :, None] * jnp.ones((2, 8, 128), jnp.float32)
        y = pl.pallas_call(probe,
                           out_shape=jax.ShapeDtypeStruct((2, 8, 128), jnp.float32))(x)
        v = float(jax.device_get(y)[0, 0, 0])
        _ROLL_MODE = "np" if v == 7.0 else ("inv" if v == 1.0 else "off")
    except Exception:
        _ROLL_MODE = "off"
    return _ROLL_MODE


# ------------------------------ fused kernel --------------------------------- #

def make_fused_kernel(*, W, Wo, THo, rows_in, stride, cin_p, hidden_p, cout_p,
                      has_expand, use_shortcut, mm_dtype, n_row_tiles, roll_mode):
    """expand(1x1)+BN+ReLU6 -> depthwise(3x3)+BN+ReLU6 -> project(1x1)+BN(+res),
    for one (batch, row-tile) grid step."""
    WPAD = 8                       # left/right halo pad in W (sublane), 8-aligned
    SZ = W + 2 * WPAD              # scratch width

    def kernel(*refs):
        if has_expand:
            (x_ref, w1_ref, b1_ref, wdw_ref, b2_ref, w3_ref, b3_ref,
             o_ref, hid_ref) = refs
        else:
            (x_ref, wdw_ref, b2_ref, w3_ref, b3_ref, o_ref, hid_ref) = refs

        r = pl.program_id(1)

        # Only scratch columns WPAD-1 and WPAD+W are ever read from the W halo:
        # zero just those two (per review), every step (scratch is per-core under
        # megacore partitioning, so a "first step" init is not expressible).
        zcol = jnp.zeros((rows_in, 1, hidden_p), jnp.float32)
        hid_ref[:, WPAD - 1:WPAD, :] = zcol
        hid_ref[:, WPAD + W:WPAD + W + 1, :] = zcol

        # Input rows for this tile (row-padded input: padded row p = original p-1).
        row0 = pl.multiple_of(r * (THo * stride), THo * stride)
        x_rows = x_ref[0, pl.ds(row0, rows_in), :, :].astype(jnp.float32)  # (rows_in, W, cin_p)

        # ---- expand 1x1 conv (MXU, mm_dtype operands, f32 accumulate) + ReLU6 ----
        if has_expand:
            x2d = x_rows.reshape(rows_in * W, cin_p)
            h = jnp.dot(x2d.astype(mm_dtype), w1_ref[...],
                        preferred_element_type=jnp.float32)
            h3 = jnp.clip(h + b1_ref[...], 0.0, 6.0).reshape(rows_in, W, hidden_p)
        else:
            h3 = x_rows                                     # hidden_p == cin_p
        hid_ref[:, WPAD:WPAD + W, :] = h3

        # Image-boundary halo rows must be zero in *hidden* space; the expand of the
        # zero-padded input rows is relu6(b1) != 0, so overwrite them on the
        # first/last row tile only.
        if has_expand:
            zrow = jnp.zeros((1, SZ, hidden_p), jnp.float32)

            @pl.when(r == 0)
            def _():
                hid_ref[0:1, :, :] = zrow

            if stride == 1:                                 # (stride=2 never reads it)
                @pl.when(r == n_row_tiles - 1)
                def _():
                    hid_ref[rows_in - 1:rows_in, :, :] = zrow

        # ---- depthwise 3x3 (VPU FMAs; W shifts on the XLU via roll when available)
        acc = None
        for dh in range(3):
            if stride == 1 and roll_mode in ("np", "inv"):
                sh_r = 1 if roll_mode == "np" else SZ - 1   # shift data to higher idx
                sh_l = SZ - 1 if roll_mode == "np" else 1   # shift data to lower idx
                slab = hid_ref[dh:dh + THo, :, :]           # one aligned full-width load
                taps = (pltpu.roll(slab, shift=sh_r, axis=1)[:, WPAD:WPAD + W, :],
                        slab[:, WPAD:WPAD + W, :],
                        pltpu.roll(slab, shift=sh_l, axis=1)[:, WPAD:WPAD + W, :])
            elif stride == 1:
                # Fallback (roll unavailable): static, slightly unaligned slices.
                taps = tuple(hid_ref[dh:dh + THo, WPAD - 1 + dw:WPAD - 1 + dw + W, :]
                             for dw in range(3))
            else:
                # TODO(synk): even/odd column pre-split instead of strided sublane reads.
                taps = tuple(hid_ref[pl.ds(dh, THo, stride),
                                     pl.ds(WPAD - 1 + dw, Wo, stride), :]
                             for dw in range(3))
            for dw in range(3):
                term = taps[dw] * wdw_ref[dh, dw:dw + 1, :]   # static Ref index per tap
                acc = term if acc is None else acc + term
        y = jnp.clip(acc + b2_ref[...], 0.0, 6.0)             # (THo, Wo, hidden_p)

        # ---- project 1x1 conv (MXU) + bias (+ residual) ----
        y2d = y.reshape(THo * Wo, hidden_p)
        out = jnp.dot(y2d.astype(mm_dtype), w3_ref[...],
                      preferred_element_type=jnp.float32) + b3_ref[...]
        if use_shortcut:                                      # stride==1, cin_p == cout_p
            xres = x_ref[0, pl.ds(r * THo + 1, THo), :, :].astype(jnp.float32)
            out = out + xres.reshape(THo * Wo, cout_p)
        o_ref[0] = out.reshape(THo, Wo, cout_p).astype(o_ref.dtype)

    return kernel


# ------------------------------ host wrappers --------------------------------- #

def fold_bn(gamma, beta, mean, var, eps=1e-5):
    scale = gamma / jnp.sqrt(var + eps)
    bias = beta - mean * scale
    return scale, bias


def inverted_residual_nhwc(x, params, *, stride, expand_ratio, in_c, out_c,
                           mm_dtype=jnp.bfloat16, pad_io=False, pad_hidden=True,
                           row_tile=None):
    N, H, W, Cin = x.shape
    assert Cin == in_c
    has_expand = expand_ratio != 1
    hidden = in_c * expand_ratio
    use_shortcut = (stride == 1) and (in_c == out_c)
    K, pad = 3, 1
    Ho = (H + 2 * pad - K) // stride + 1
    Wo = (W + 2 * pad - K) // stride + 1
    assert W % 8 == 0 and Wo % 8 == 0, "W and Wo must be multiples of 8"

    # Lane-dense channel padding (exact: padded channels carry zeros end-to-end).
    LANE = 128
    cin_p = _rup(in_c, LANE) if pad_io else in_c
    cout_p = _rup(out_c, LANE) if pad_io else out_c
    if has_expand:
        hidden_p = _rup(hidden, LANE) if pad_hidden else hidden
    else:
        hidden_p = cin_p                                    # hidden IS the input

    # Host-pad: +1 row of zeros top/bottom (depthwise halo source), channel padding.
    xp = jnp.pad(x, ((0, 0), (1, 1), (0, 0), (0, cin_p - in_c)))

    # Fold BN scale into the conv weights (kernels only add bias); pad; cast matmul
    # weights to mm_dtype (bf16 => ~3x MXU throughput, f32 accumulate in-kernel).
    args = [xp]
    in_specs = [pl.BlockSpec((1, H + 2, W, cin_p), lambda n, r: (n, 0, 0, 0))]
    if has_expand:
        s1, b1 = fold_bn(*params["bn1"])
        w1 = jnp.pad(params["w_expand"] * s1[None, :],
                     ((0, cin_p - in_c), (0, hidden_p - hidden))).astype(mm_dtype)
        b1p = jnp.pad(b1, (0, hidden_p - hidden)).reshape(1, hidden_p).astype(jnp.float32)
        args += [w1, b1p]
        in_specs += [pl.BlockSpec((cin_p, hidden_p), lambda n, r: (0, 0)),
                     pl.BlockSpec((1, hidden_p), lambda n, r: (0, 0))]
    s2, b2 = fold_bn(*params["bn2"])
    wdw = jnp.pad(params["w_dw"] * s2[None, None, :],
                  ((0, 0), (0, 0), (0, hidden_p - hidden))).astype(jnp.float32)
    b2p = jnp.pad(b2, (0, hidden_p - hidden)).reshape(1, hidden_p).astype(jnp.float32)
    s3, b3 = fold_bn(*params["bn3"])
    w3 = jnp.pad(params["w_proj"] * s3[None, :],
                 ((0, hidden_p - hidden), (0, cout_p - out_c))).astype(mm_dtype)
    b3p = jnp.pad(b3, (0, cout_p - out_c)).reshape(1, cout_p).astype(jnp.float32)
    args += [wdw, b2p, w3, b3p]
    in_specs += [pl.BlockSpec((3, 3, hidden_p), lambda n, r: (0, 0, 0)),
                 pl.BlockSpec((1, hidden_p), lambda n, r: (0, 0)),
                 pl.BlockSpec((hidden_p, cout_p), lambda n, r: (0, 0)),
                 pl.BlockSpec((1, cout_p), lambda n, r: (0, 0))]

    THo = row_tile if row_tile is not None else _pick_row_tile(Ho, W, hidden_p, stride)
    assert Ho % THo == 0, "row_tile must divide Ho"
    n_row_tiles = Ho // THo
    rows_in = (THo - 1) * stride + 3                        # input rows incl. halo

    roll_mode = _probe_roll_mode() if stride == 1 else "off"

    kernel = make_fused_kernel(W=W, Wo=Wo, THo=THo, rows_in=rows_in, stride=stride,
                               cin_p=cin_p, hidden_p=hidden_p, cout_p=cout_p,
                               has_expand=has_expand, use_shortcut=use_shortcut,
                               mm_dtype=mm_dtype, n_row_tiles=n_row_tiles,
                               roll_mode=roll_mode)

    # Generation-aware VMEM budget, including in-kernel f32 temporaries.
    f32b = 4
    mmb = jnp.dtype(mm_dtype).itemsize
    weight_bytes = (9 * hidden_p + hidden_p + cout_p) * f32b + hidden_p * cout_p * mmb
    if has_expand:
        weight_bytes += cin_p * hidden_p * mmb + hidden_p * f32b
    in_tile = (H + 2) * W * cin_p * f32b
    out_tile = THo * Wo * cout_p * f32b
    scratch_bytes = rows_in * (W + 16) * hidden_p * f32b
    temp_bytes = f32b * (rows_in * W * hidden_p                 # expand output value
                         + 3 * THo * (W + 16) * hidden_p        # tap slabs / rolls
                         + 2 * THo * Wo * hidden_p              # dw acc + y
                         + 2 * THo * Wo * cout_p)               # project out + residual
    per_step = 2 * (in_tile + out_tile + weight_bytes) + scratch_bytes + temp_bytes
    cap = _vmem_capacity_bytes()
    frac = 0.625 if cap <= 64 * 2**20 else 0.75                 # ~40 MiB v7x, ~96 MiB v5e/v6e
    vmem_limit = int(min(cap * frac, max(32 * 2**20, 2 * per_step)))

    flops = 2 * 9 * N * Ho * Wo * hidden_p + 2 * N * Ho * Wo * hidden_p * cout_p
    if has_expand:
        flops += 2 * N * (H + 2) * W * cin_p * hidden_p         # includes halo recompute
    bytes_accessed = (N * (H + 2) * W * cin_p + N * Ho * Wo * cout_p) * f32b + weight_bytes

    y = pl.pallas_call(
        kernel,
        out_shape=jax.ShapeDtypeStruct((N, Ho, Wo, cout_p), x.dtype),
        grid=(N, n_row_tiles),
        in_specs=in_specs,
        out_specs=pl.BlockSpec((1, THo, Wo, cout_p), lambda n, r: (n, r, 0, 0)),
        scratch_shapes=[pltpu.VMEM((rows_in, W + 16, hidden_p), jnp.float32)],
        compiler_params=pltpu.CompilerParams(
            dimension_semantics=("parallel", "parallel"),
            vmem_limit_bytes=vmem_limit),
        cost_estimate=pl.CostEstimate(flops=int(flops), transcendentals=0,
                                      bytes_accessed=int(bytes_accessed)),
    )(*args)
    return y[..., :out_c] if cout_p != out_c else y


def inverted_residual(x_nchw, params, *, stride, expand_ratio, in_c, out_c,
                      mm_dtype=jnp.bfloat16, pad_io=False, row_tile=None):
    """PyTorch-layout (NCHW) wrapper for parity with the nn.Module.  Production
    should keep activations NHWC (and channel-padded) across blocks and call
    inverted_residual_nhwc directly to avoid per-block transposes/HBM round trips."""
    x = jnp.transpose(x_nchw, (0, 2, 3, 1))                 # NCHW -> NHWC
    y = inverted_residual_nhwc(x, params, stride=stride, expand_ratio=expand_ratio,
                               in_c=in_c, out_c=out_c, mm_dtype=mm_dtype,
                               pad_io=pad_io, row_tile=row_tile)
    return jnp.transpose(y, (0, 3, 1, 2))                   # NHWC -> NCHW


# ---------------------------- params & reference ------------------------------ #

def _bn_init(key, c):
    k1, k2, k3, k4 = jax.random.split(key, 4)
    gamma = jax.random.uniform(k1, (c,), jnp.float32, 0.5, 1.5)
    beta = jax.random.normal(k2, (c,), jnp.float32) * 0.1
    mean = jax.random.normal(k3, (c,), jnp.float32) * 0.1
    var = jax.random.uniform(k4, (c,), jnp.float32, 0.5, 1.5)
    return (gamma, beta, mean, var)


def init_params(key, in_c, out_c, expand_ratio):
    hidden = in_c * expand_ratio
    keys = jax.random.split(key, 6)
    params = {}
    if expand_ratio != 1:
        params["w_expand"] = jax.random.normal(keys[0], (in_c, hidden), jnp.float32) * 0.1
        params["bn1"] = _bn_init(keys[1], hidden)
    params["w_dw"] = jax.random.normal(keys[2], (3, 3, hidden), jnp.float32) * 0.1
    params["bn2"] = _bn_init(keys[3], hidden)
    params["w_proj"] = jax.random.normal(keys[4], (hidden, out_c), jnp.float32) * 0.1
    params["bn3"] = _bn_init(keys[5], out_c)
    return params


def ref_forward(x_nchw, params, *, stride, expand_ratio, in_c, out_c):
    """Pure-JAX f32 reference with the module's math (BN in inference form)."""
    x = jnp.transpose(x_nchw, (0, 2, 3, 1))
    h = x
    if expand_ratio != 1:
        s, b = fold_bn(*params["bn1"])
        h = jnp.clip(jnp.einsum("nhwc,cd->nhwd", h, params["w_expand"]) * s + b, 0.0, 6.0)
    s, b = fold_bn(*params["bn2"])
    K, pad = 3, 1
    hp = jnp.pad(h, ((0, 0), (pad, pad), (pad, pad), (0, 0)))
    N, H, W, C = h.shape
    Ho = (H + 2 * pad - K) // stride + 1
    Wo = (W + 2 * pad - K) // stride + 1
    acc = jnp.zeros((N, Ho, Wo, C), jnp.float32)
    for dh in range(K):
        for dw in range(K):
            acc = acc + hp[:, dh:dh + Ho * stride:stride,
                           dw:dw + Wo * stride:stride, :] * params["w_dw"][dh, dw, :]
    h = jnp.clip(acc * s + b, 0.0, 6.0)
    s, b = fold_bn(*params["bn3"])
    h = jnp.einsum("nhwc,cd->nhwd", h, params["w_proj"]) * s + b
    if stride == 1 and in_c == out_c:
        h = h + x
    return jnp.transpose(h, (0, 3, 1, 2))


# --------------------------------- main ---------------------------------------- #

if __name__ == "__main__":
    key = jax.random.PRNGKey(0)

    configs = [
        # f32 MXU operands, no I/O padding: bit-close check of the fused structure
        # (row tiling, halo recompute, roll taps, hidden padding are all exact).
        dict(N=2, in_c=4, out_c=4, H=16, W=16, stride=1, expand=2,
             mm_dtype=jnp.float32, pad_io=False, atol=1e-4, rtol=1e-4),
        # bf16 MXU operands + lane-dense channel padding (cin/cout/hidden -> 128).
        dict(N=2, in_c=8, out_c=16, H=16, W=16, stride=1, expand=6,
             mm_dtype=jnp.bfloat16, pad_io=True, atol=1e-1, rtol=1e-1),
        # no-expand branch with shortcut, bf16 project matmul.
        dict(N=2, in_c=8, out_c=8, H=16, W=16, stride=1, expand=1,
             mm_dtype=jnp.bfloat16, pad_io=False, atol=1e-1, rtol=1e-1),
    ]

    for i, cfg in enumerate(configs):
        key, kx, kp = jax.random.split(key, 3)
        x = jax.random.normal(kx, (cfg["N"], cfg["in_c"], cfg["H"], cfg["W"]),
                              jnp.float32)                     # PyTorch-style NCHW
        params = init_params(kp, cfg["in_c"], cfg["out_c"], cfg["expand"])

        out = inverted_residual(x, params, stride=cfg["stride"],
                                expand_ratio=cfg["expand"],
                                in_c=cfg["in_c"], out_c=cfg["out_c"],
                                mm_dtype=cfg["mm_dtype"], pad_io=cfg["pad_io"])
        out = jax.block_until_ready(out)

        ref = ref_forward(x, params, stride=cfg["stride"],
                          expand_ratio=cfg["expand"],
                          in_c=cfg["in_c"], out_c=cfg["out_c"])
        assert out.shape == ref.shape, f"shape mismatch in config {i}"
        assert jnp.allclose(out, ref, atol=cfg["atol"], rtol=cfg["rtol"]), \
            f"value mismatch in config {i}"

    print("KERNEL_OK")
</pallas_src>

<mosaic_0001>
module attributes {stable_mosaic.version = 11 : i64} {
  func.func @probe(%arg0: memref<2x8x128xf32, #tpu.memory_space<vmem>>, %arg1: memref<2x8x128xf32, #tpu.memory_space<vmem>>) attributes {dimension_semantics = [], scalar_prefetch = 0 : i64, scratch_operands = 0 : i64, tpu.core_type = #tpu.core_type<tc>} {
    %c0 = arith.constant 0 : index
    %c0_0 = arith.constant 0 : index
    %c0_1 = arith.constant 0 : index
    %0 = vector.load %arg0[%c0, %c0_0, %c0_1] : memref<2x8x128xf32, #tpu.memory_space<vmem>>, vector<2x8x128xf32>
    %c1_i32 = arith.constant 1 : i32
    %1 = tpu.dynamic_rotate %0 by %c1_i32 dim 1 : vector<2x8x128xf32>, i32 -> vector<2x8x128xf32>
    %c0_2 = arith.constant 0 : index
    %c0_3 = arith.constant 0 : index
    %c0_4 = arith.constant 0 : index
    %2 = vector.load %arg1[%c0_2, %c0_3, %c0_4] : memref<2x8x128xf32, #tpu.memory_space<vmem>>, vector<2x8x128xf32>
    tpu.vector_store %arg1[%c0_2, %c0_3, %c0_4], %1 {strides = array<i32>} : memref<2x8x128xf32, #tpu.memory_space<vmem>>, vector<2x8x128xf32>,
    return
  }
}

module attributes {stable_mosaic.version = 11 : i64} {
  func.func @kernel(%arg0: i32, %arg1: i32, %arg2: memref<1x18x16x4xf32, #tpu.memory_space<vmem>>, %arg3: memref<4x128xf32, #tpu.memory_space<vmem>>, %arg4: memref<1x128xf32, #tpu.memory_space<vmem>>, %arg5: memref<3x3x128xf32, #tpu.memory_space<vmem>>, %arg6: memref<1x128xf32, #tpu.memory_space<vmem>>, %arg7: memref<128x4xf32, #tpu.memory_space<vmem>>, %arg8: memref<1x4xf32, #tpu.memory_space<vmem>>, %arg9: memref<1x8x16x4xf32, #tpu.memory_space<vmem>>, %arg10: memref<10x32x128xf32, #tpu.memory_space<vmem>>) attributes {dimension_semantics = [#tpu.dimension_semantics<parallel>, #tpu.dimension_semantics<parallel>], iteration_bounds = array<i64: 2, 2>, scalar_prefetch = 0 : i64, scratch_operands = 1 : i64, tpu.core_type = #tpu.core_type<tc>, window_params = [{transform_indices = @transform_0, window_bounds = array<i64: 1, 18, 16, 4>}, {pipeline_mode = #tpu.pipeline_mode<synchronous>, transform_indices = @transform_1, window_bounds = array<i64: 4, 128>}, {pipeline_mode = #tpu.pipeline_mode<synchronous>, transform_indices = @transform_2, window_bounds = array<i64: 1, 128>}, {pipeline_mode = #tpu.pipeline_mode<synchronous>, transform_indices = @transform_3, window_bounds = array<i64: 3, 3, 128>}, {pipeline_mode = #tpu.pipeline_mode<synchronous>, transform_indices = @transform_4, window_bounds = array<i64: 1, 128>}, {pipeline_mode = #tpu.pipeline_mode<synchronous>, transform_indices = @transform_5, window_bounds = array<i64: 128, 4>}, {pipeline_mode = #tpu.pipeline_mode<synchronous>, transform_indices = @transform_6, window_bounds = array<i64: 1, 4>}, {transform_indices = @transform_7, window_bounds = array<i64: 1, 8, 16, 4>}]} {
    %cst = arith.constant 0.000000e+00 : f32
    %0 = vector.broadcast %cst : f32 to vector<10x1x128xf32>
    %c0 = arith.constant 0 : index
    %c7 = arith.constant 7 : index
    %c0_0 = arith.constant 0 : index
    %1 = vector.load %arg10[%c0, %c7, %c0_0] : memref<10x32x128xf32, #tpu.memory_space<vmem>>, vector<10x1x128xf32>
    tpu.vector_store %arg10[%c0, %c7, %c0_0], %0 {strides = array<i32>} : memref<10x32x128xf32, #tpu.memory_space<vmem>>, vector<10x1x128xf32>,
    %c0_1 = arith.constant 0 : index
    %c24 = arith.constant 24 : index
    %c0_2 = arith.constant 0 : index
    %2 = vector.load %arg10[%c0_1, %c24, %c0_2] : memref<10x32x128xf32, #tpu.memory_space<vmem>>, vector<10x1x128xf32>
    tpu.vector_store %arg10[%c0_1, %c24, %c0_2], %0 {strides = array<i32>} : memref<10x32x128xf32, #tpu.memory_space<vmem>>, vector<10x1x128xf32>,
    %c8_i32 = arith.constant 8 : i32
    %3 = arith.muli %arg1, %c8_i32 : i32
    %4 = tpu.assume_multiple %3, 8 : i32
    %c0_3 = arith.constant 0 : index
    %5 = arith.index_cast %4 : i32 to index
    %c0_4 = arith.constant 0 : index
    %c0_5 = arith.constant 0 : index
    %6 = vector.load %arg2[%c0_3, %5, %c0_4, %c0_5] : memref<1x18x16x4xf32, #tpu.memory_space<vmem>>, vector<1x10x16x4xf32>
    %7 = vector.shape_cast %6 : vector<1x10x16x4xf32> to vector<10x16x4xf32>
    %8 = vector.shape_cast %7 : vector<10x16x4xf32> to vector<160x4xf32>
    %c0_6 = arith.constant 0 : index
    %c0_7 = arith.constant 0 : index
    %9 = vector.load %arg3[%c0_6, %c0_7] : memref<4x128xf32, #tpu.memory_space<vmem>>, vector<4x128xf32>
    %cst_8 = arith.constant dense<0.000000e+00> : vector<160x128xf32>
    %10 = tpu.matmul %8, %9, %cst_8 {dimension_numbers = #tpu.dot_dimension_numbers<[1], [0], [0], [1], [0, 0, 1, 1], [], []>} : vector<160x4xf32>, vector<4x128xf32>, vector<160x128xf32> -> vector<160x128xf32>
    %c0_9 = arith.constant 0 : index
    %c0_10 = arith.constant 0 : index
    %11 = vector.load %arg4[%c0_9, %c0_10] : memref<1x128xf32, #tpu.memory_space<vmem>>, vector<1x128xf32>
    %12 = vector.broadcast %11 : vector<1x128xf32> to vector<160x128xf32>
    %13 = arith.addf %10, %12 : vector<160x128xf32>
    %cst_11 = arith.constant 0.000000e+00 : f32
    %cst_12 = arith.constant 6.000000e+00 : f32
    %14 = vector.broadcast %cst_11 : f32 to vector<160x128xf32>
    %15 = arith.maximumf %14, %13 : vector<160x128xf32>
    %16 = vector.broadcast %cst_12 : f32 to vector<160x128xf32>
    %17 = arith.minimumf %16, %15 : vector<160x128xf32>
    %18 = vector.shape_cast %17 : vector<160x128xf32> to vector<10x16x128xf32>
    %c0_13 = arith.constant 0 : index
    %c8 = arith.constant 8 : index
    %c0_14 = arith.constant 0 : index
    %19 = vector.load %arg10[%c0_13, %c8, %c0_14] : memref<10x32x128xf32, #tpu.memory_space<vmem>>, vector<10x16x128xf32>
    tpu.vector_store %arg10[%c0_13, %c8, %c0_14], %18 {strides = array<i32>} : memref<10x32x128xf32, #tpu.memory_space<vmem>>, vector<10x16x128xf32>,
    %cst_15 = arith.constant 0.000000e+00 : f32
    %20 = vector.broadcast %cst_15 : f32 to vector<1x32x128xf32>
    %c0_i32 = arith.constant 0 : i32
    %21 = arith.cmpi eq, %arg1, %c0_i32 : i32
    %22 = arith.extui %21 : i1 to i32
    %c0_i32_16 = arith.constant 0 : i32
    %23 = arith.cmpi ne, %22, %c0_i32_16 : i32
    scf.if %23 {
      %c0_87 = arith.constant 0 : index
      %c0_88 = arith.constant 0 : index
      %c0_89 = arith.constant 0 : index
      %114 = vector.load %arg10[%c0_87, %c0_88, %c0_89] : memref<10x32x128xf32, #tpu.memory_space<vmem>>, vector<1x32x128xf32>
      tpu.vector_store %arg10[%c0_87, %c0_88, %c0_89], %20 {strides = array<i32>} : memref<10x32x128xf32, #tpu.memory_space<vmem>>, vector<1x32x128xf32>,
    } else {
    }
    %c1_i32 = arith.constant 1 : i32
    %24 = arith.cmpi eq, %arg1, %c1_i32 : i32
    %25 = arith.extui %24 : i1 to i32
    %c0_i32_17 = arith.constant 0 : i32
    %26 = arith.cmpi ne, %25, %c0_i32_17 : i32
    scf.if %26 {
      %c9_87 = arith.constant 9 : index
      %c0_88 = arith.constant 0 : index
      %c0_89 = arith.constant 0 : index
      %114 = vector.load %arg10[%c9_87, %c0_88, %c0_89] : memref<10x32x128xf32, #tpu.memory_space<vmem>>, vector<1x32x128xf32>
      tpu.vector_store %arg10[%c9_87, %c0_88, %c0_89], %20 {strides = array<i32>} : memref<10x32x128xf32, #tpu.memory_space<vmem>>, vector<1x32x128xf32>,
    } else {
    }
    %c0_18 = arith.constant 0 : index
    %c7_19 = arith.constant 7 : index
    %c0_20 = arith.constant 0 : index
    %27 = vector.load %arg10[%c0_18, %c7_19, %c0_20] : memref<10x32x128xf32, #tpu.memory_space<vmem>>, vector<8x16x128xf32>
    %c0_21 = arith.constant 0 : index
    %c8_22 = arith.constant 8 : index
    %c0_23 = arith.constant 0 : index
    %28 = vector.load %arg10[%c0_21, %c8_22, %c0_23] : memref<10x32x128xf32, #tpu.memory_space<vmem>>, vector<8x16x128xf32>
    %c0_24 = arith.constant 0 : index
    %c9 = arith.constant 9 : index
    %c0_25 = arith.constant 0 : index
    %29 = vector.load %arg10[%c0_24, %c9, %c0_25] : memref<10x32x128xf32, #tpu.memory_space<vmem>>, vector<8x16x128xf32>
    %c0_26 = arith.constant 0 : index
    %c0_27 = arith.constant 0 : index
    %c0_28 = arith.constant 0 : index
    %30 = vector.load %arg5[%c0_26, %c0_27, %c0_28] : memref<3x3x128xf32, #tpu.memory_space<vmem>>, vector<1x1x128xf32>
    %31 = vector.shape_cast %30 : vector<1x1x128xf32> to vector<1x128xf32>
    %32 = vector.shape_cast %31 : vector<1x128xf32> to vector<1x1x128xf32>
    %33 = vector.broadcast %32 : vector<1x1x128xf32> to vector<8x16x128xf32>
    %34 = arith.mulf %27, %33 : vector<8x16x128xf32>
    %c0_29 = arith.constant 0 : index
    %c1 = arith.constant 1 : index
    %c0_30 = arith.constant 0 : index
    %35 = vector.load %arg5[%c0_29, %c1, %c0_30] : memref<3x3x128xf32, #tpu.memory_space<vmem>>, vector<1x1x128xf32>
    %36 = vector.shape_cast %35 : vector<1x1x128xf32> to vector<1x128xf32>
    %37 = vector.shape_cast %36 : vector<1x128xf32> to vector<1x1x128xf32>
    %38 = vector.broadcast %37 : vector<1x1x128xf32> to vector<8x16x128xf32>
    %39 = arith.mulf %28, %38 : vector<8x16x128xf32>
    %40 = arith.addf %34, %39 : vector<8x16x128xf32>
    %c0_31 = arith.constant 0 : index
    %c2 = arith.constant 2 : index
    %c0_32 = arith.constant 0 : index
    %41 = vector.load %arg5[%c0_31, %c2, %c0_32] : memref<3x3x128xf32, #tpu.memory_space<vmem>>, vector<1x1x128xf32>
    %42 = vector.shape_cast %41 : vector<1x1x128xf32> to vector<1x128xf32>
    %43 = vector.shape_cast %42 : vector<1x128xf32> to vector<1x1x128xf32>
    %44 = vector.broadcast %43 : vector<1x1x128xf32> to vector<8x16x128xf32>
    %45 = arith.mulf %29, %44 : vector<8x16x128xf32>
    %46 = arith.addf %40, %45 : vector<8x16x128xf32>
    %c1_33 = arith.constant 1 : index
    %c7_34 = arith.constant 7 : index
    %c0_35 = arith.constant 0 : index
    %47 = vector.load %arg10[%c1_33, %c7_34, %c0_35] : memref<10x32x128xf32, #tpu.memory_space<vmem>>, vector<8x16x128xf32>
    %c1_36 = arith.constant 1 : index
    %c8_37 = arith.constant 8 : index
    %c0_38 = arith.constant 0 : index
    %48 = vector.load %arg10[%c1_36, %c8_37, %c0_38] : memref<10x32x128xf32, #tpu.memory_space<vmem>>, vector<8x16x128xf32>
    %c1_39 = arith.constant 1 : index
    %c9_40 = arith.constant 9 : index
    %c0_41 = arith.constant 0 : index
    %49 = vector.load %arg10[%c1_39, %c9_40, %c0_41] : memref<10x32x128xf32, #tpu.memory_space<vmem>>, vector<8x16x128xf32>
    %c1_42 = arith.constant 1 : index
    %c0_43 = arith.constant 0 : index
    %c0_44 = arith.constant 0 : index
    %50 = vector.load %arg5[%c1_42, %c0_43, %c0_44] : memref<3x3x128xf32, #tpu.memory_space<vmem>>, vector<1x1x128xf32>
    %51 = vector.shape_cast %50 : vector<1x1x128xf32> to vector<1x128xf32>
    %52 = vector.shape_cast %51 : vector<1x128xf32> to vector<1x1x128xf32>
    %53 = vector.broadcast %52 : vector<1x1x128xf32> to vector<8x16x128xf32>
    %54 = arith.mulf %47, %53 : vector<8x16x128xf32>
    %55 = arith.addf %46, %54 : vector<8x16x128xf32>
    %c1_45 = arith.constant 1 : index
    %c1_46 = arith.constant 1 : index
    %c0_47 = arith.constant 0 : index
    %56 = vector.load %arg5[%c1_45, %c1_46, %c0_47] : memref<3x3x128xf32, #tpu.memory_space<vmem>>, vector<1x1x128xf32>
    %57 = vector.shape_cast %56 : vector<1x1x128xf32> to vector<1x128xf32>
    %58 = vector.shape_cast %57 : vector<1x128xf32> to vector<1x1x128xf32>
    %59 = vector.broadcast %58 : vector<1x1x128xf32> to vector<8x16x128xf32>
    %60 = arith.mulf %48, %59 : vector<8x16x128xf32>
    %61 = arith.addf %55, %60 : vector<8x16x128xf32>
    %c1_48 = arith.constant 1 : index
    %c2_49 = arith.constant 2 : index
    %c0_50 = arith.constant 0 : index
    %62 = vector.load %arg5[%c1_48, %c2_49, %c0_50] : memref<3x3x128xf32, #tpu.memory_space<vmem>>, vector<1x1x128xf32>
    %63 = vector.shape_cast %62 : vector<1x1x128xf32> to vector<1x128xf32>
    %64 = vector.shape_cast %63 : vector<1x128xf32> to vector<1x1x128xf32>
    %65 = vector.broadcast %64 : vector<1x1x128xf32> to vector<8x16x128xf32>
    %66 = arith.mulf %49, %65 : vector<8x16x128xf32>
    %67 = arith.addf %61, %66 : vector<8x16x128xf32>
    %c2_51 = arith.constant 2 : index
    %c7_52 = arith.constant 7 : index
    %c0_53 = arith.constant 0 : index
    %68 = vector.load %arg10[%c2_51, %c7_52, %c0_53] : memref<10x32x128xf32, #tpu.memory_space<vmem>>, vector<8x16x128xf32>
    %c2_54 = arith.constant 2 : index
    %c8_55 = arith.constant 8 : index
    %c0_56 = arith.constant 0 : index
    %69 = vector.load %arg10[%c2_54, %c8_55, %c0_56] : memref<10x32x128xf32, #tpu.memory_space<vmem>>, vector<8x16x128xf32>
    %c2_57 = arith.constant 2 : index
    %c9_58 = arith.constant 9 : index
    %c0_59 = arith.constant 0 : index
    %70 = vector.load %arg10[%c2_57, %c9_58, %c0_59] : memref<10x32x128xf32, #tpu.memory_space<vmem>>, vector<8x16x128xf32>
    %c2_60 = arith.constant 2 : index
    %c0_61 = arith.constant 0 : index
    %c0_62 = arith.constant 0 : index
    %71 = vector.load %arg5[%c2_60, %c0_61, %c0_62] : memref<3x3x128xf32, #tpu.memory_space<vmem>>, vector<1x1x128xf32>
    %72 = vector.shape_cast %71 : vector<1x1x128xf32> to vector<1x128xf32>
    %73 = vector.shape_cast %72 : vector<1x128xf32> to vector<1x1x128xf32>
    %74 = vector.broadcast %73 : vector<1x1x128xf32> to vector<8x16x128xf32>
    %75 = arith.mulf %68, %74 : vector<8x16x128xf32>
    %76 = arith.addf %67, %75 : vector<8x16x128xf32>
    %c2_63 = arith.constant 2 : index
    %c1_64 = arith.constant 1 : index
    %c0_65 = arith.constant 0 : index
    %77 = vector.load %arg5[%c2_63, %c1_64, %c0_65] : memref<3x3x128xf32, #tpu.memory_space<vmem>>, vector<1x1x128xf32>
    %78 = vector.shape_cast %77 : vector<1x1x128xf32> to vector<1x128xf32>
    %79 = vector.shape_cast %78 : vector<1x128xf32> to vector<1x1x128xf32>
    %80 = vector.broadcast %79 : vector<1x1x128xf32> to vector<8x16x128xf32>
    %81 = arith.mulf %69, %80 : vector<8x16x128xf32>
    %82 = arith.addf %76, %81 : vector<8x16x128xf32>
    %c2_66 = arith.constant 2 : index
    %c2_67 = arith.constant 2 : index
    %c0_68 = arith.constant 0 : index
    %83 = vector.load %arg5[%c2_66, %c2_67, %c0_68] : memref<3x3x128xf32, #tpu.memory_space<vmem>>, vector<1x1x128xf32>
    %84 = vector.shape_cast %83 : vector<1x1x128xf32> to vector<1x128xf32>
    %85 = vector.shape_cast %84 : vector<1x128xf32> to vector<1x1x128xf32>
    %86 = vector.broadcast %85 : vector<1x1x128xf32> to vector<8x16x128xf32>
    %87 = arith.mulf %70, %86 : vector<8x16x128xf32>
    %88 = arith.addf %82, %87 : vector<8x16x128xf32>
    %c0_69 = arith.constant 0 : index
    %c0_70 = arith.constant 0 : index
    %89 = vector.load %arg6[%c0_69, %c0_70] : memref<1x128xf32, #tpu.memory_space<vmem>>, vector<1x128xf32>
    %90 = vector.shape_cast %89 : vector<1x128xf32> to vector<1x1x128xf32>
    %91 = vector.broadcast %90 : vector<1x1x128xf32> to vector<8x16x128xf32>
    %92 = arith.addf %88, %91 : vector<8x16x128xf32>
    %cst_71 = arith.constant 0.000000e+00 : f32
    %cst_72 = arith.constant 6.000000e+00 : f32
    %93 = vector.broadcast %cst_71 : f32 to vector<8x16x128xf32>
    %94 = arith.maximumf %93, %92 : vector<8x16x128xf32>
    %95 = vector.broadcast %cst_72 : f32 to vector<8x16x128xf32>
    %96 = arith.minimumf %95, %94 : vector<8x16x128xf32>
    %97 = vector.shape_cast %96 : vector<8x16x128xf32> to vector<128x128xf32>
    %c0_73 = arith.constant 0 : index
    %c0_74 = arith.constant 0 : index
    %98 = vector.load %arg7[%c0_73, %c0_74] : memref<128x4xf32, #tpu.memory_space<vmem>>, vector<128x4xf32>
    %cst_75 = arith.constant dense<0.000000e+00> : vector<128x4xf32>
    %99 = tpu.matmul %97, %98, %cst_75 {dimension_numbers = #tpu.dot_dimension_numbers<[1], [0], [0], [1], [0, 0, 1, 1], [], []>} : vector<128x128xf32>, vector<128x4xf32>, vector<128x4xf32> -> vector<128x4xf32>
    %c0_76 = arith.constant 0 : index
    %c0_77 = arith.constant 0 : index
    %100 = vector.load %arg8[%c0_76, %c0_77] : memref<1x4xf32, #tpu.memory_space<vmem>>, vector<1x4xf32>
    %101 = vector.broadcast %100 : vector<1x4xf32> to vector<128x4xf32>
    %102 = arith.addf %99, %101 : vector<128x4xf32>
    %c8_i32_78 = arith.constant 8 : i32
    %103 = arith.muli %arg1, %c8_i32_78 : i32
    %c1_i32_79 = arith.constant 1 : i32
    %104 = arith.addi %103, %c1_i32_79 : i32
    %c0_80 = arith.constant 0 : index
    %105 = arith.index_cast %104 : i32 to index
    %c0_81 = arith.constant 0 : index
    %c0_82 = arith.constant 0 : index
    %106 = vector.load %arg2[%c0_80, %105, %c0_81, %c0_82] : memref<1x18x16x4xf32, #tpu.memory_space<vmem>>, vector<1x8x16x4xf32>
    %107 = vector.shape_cast %106 : vector<1x8x16x4xf32> to vector<8x16x4xf32>
    %108 = vector.shape_cast %107 : vector<8x16x4xf32> to vector<128x4xf32>
    %109 = arith.addf %102, %108 : vector<128x4xf32>
    %110 = vector.shape_cast %109 : vector<128x4xf32> to vector<8x16x4xf32>
    %c0_83 = arith.constant 0 : index
    %c0_84 = arith.constant 0 : index
    %c0_85 = arith.constant 0 : index
    %c0_86 = arith.constant 0 : index
    %111 = vector.load %arg9[%c0_83, %c0_84, %c0_85, %c0_86] : memref<1x8x16x4xf32, #tpu.memory_space<vmem>>, vector<1x8x16x4xf32>
    %112 = vector.shape_cast %111 : vector<1x8x16x4xf32> to vector<8x16x4xf32>
    %113 = vector.shape_cast %110 : vector<8x16x4xf32> to vector<1x8x16x4xf32>
    tpu.vector_store %arg9[%c0_83, %c0_84, %c0_85, %c0_86], %113 {strides = array<i32>} : memref<1x8x16x4xf32, #tpu.memory_space<vmem>>, vector<1x8x16x4xf32>,
    return
  }
  func.func @transform_0(%arg0: i32, %arg1: i32) -> (i32, i32, i32, i32) {
    %c0_i32 = arith.constant 0 : i32
    %c0_i32_0 = arith.constant 0 : i32
    %c0_i32_1 = arith.constant 0 : i32
    %c0_i32_2 = arith.constant 0 : i32
    return %arg0, %c0_i32, %c0_i32_0, %c0_i32_1 : i32, i32, i32, i32
  }
  func.func @transform_1(%arg0: i32, %arg1: i32) -> (i32, i32) {
    %c0_i32 = arith.constant 0 : i32
    %c0_i32_0 = arith.constant 0 : i32
    %c0_i32_1 = arith.constant 0 : i32
    return %c0_i32, %c0_i32_0 : i32, i32
  }
  func.func @transform_2(%arg0: i32, %arg1: i32) -> (i32, i32) {
    %c0_i32 = arith.constant 0 : i32
    %c0_i32_0 = arith.constant 0 : i32
    %c0_i32_1 = arith.constant 0 : i32
    return %c0_i32, %c0_i32_0 : i32, i32
  }
  func.func @transform_3(%arg0: i32, %arg1: i32) -> (i32, i32, i32) {
    %c0_i32 = arith.constant 0 : i32
    %c0_i32_0 = arith.constant 0 : i32
    %c0_i32_1 = arith.constant 0 : i32
    %c0_i32_2 = arith.constant 0 : i32
    return %c0_i32, %c0_i32_0, %c0_i32_1 : i32, i32, i32
  }
  func.func @transform_4(%arg0: i32, %arg1: i32) -> (i32, i32) {
    %c0_i32 = arith.constant 0 : i32
    %c0_i32_0 = arith.constant 0 : i32
    %c0_i32_1 = arith.constant 0 : i32
    return %c0_i32, %c0_i32_0 : i32, i32
  }
  func.func @transform_5(%arg0: i32, %arg1: i32) -> (i32, i32) {
    %c0_i32 = arith.constant 0 : i32
    %c0_i32_0 = arith.constant 0 : i32
    %c0_i32_1 = arith.constant 0 : i32
    return %c0_i32, %c0_i32_0 : i32, i32
  }
  func.func @transform_6(%arg0: i32, %arg1: i32) -> (i32, i32) {
    %c0_i32 = arith.constant 0 : i32
    %c0_i32_0 = arith.constant 0 : i32
    %c0_i32_1 = arith.constant 0 : i32
    return %c0_i32, %c0_i32_0 : i32, i32
  }
  func.func @transform_7(%arg0: i32, %arg1: i32) -> (i32, i32, i32, i32) {
    %c0_i32 = arith.constant 0 : i32
    %c0_i32_0 = arith.constant 0 : i32
    %c0_i32_1 = arith.constant 0 : i32
    return %arg0, %arg1, %c0_i32, %c0_i32_0 : i32, i32, i32, i32
  }
}

</mosaic_0001>

<llo_original>
// kernel: tpu_custom_call.1
$region0: #{tpu_custom_call.1}
  #allocation0 [shape = 'u32[]', space=smem, size = 0x4, offset = 0x4, fixed_abs, tag = 'smem constant byte address 0x4 - core index']
  #allocation1 [shape = 'u32[144,128]{1,0:T(1,128)}', space=vmem, size = 0x12000, scoped, tag = 'internal scratch']
  %s0 = inlined_call_operand.hbm [shape: f32[2,8,128], index: 0, kind: input, shape index: {}]
  %s1 = inlined_call_operand.hbm [shape: f32[2,8,128], index: 1, kind: output, shape index: {}]
  %s2 = sld [smem:[#allocation0]]
  $region18: #{tpu_custom_call.1} parent=0
    _
  %s4 = ssub.s32 1, %s2
  %s5 = scalar_select 0, %s4, %s2
  $region1: #{tpu_custom_call.1} parent=0
    #allocation2 [shape = 'u8[8192]{0}', space=vmem, size = 0x2000, scoped, tag = 'input window, operand 0, single buffered']
    #allocation3 [shape = 's32[1]{0}', space=sflag, size = 0x4, scoped, tag = 'scoped memory for tpu_custom_call.1']
    #allocation4 [shape = 's32[1]{0}', space=sflag, size = 0x4, scoped, tag = 'scoped memory for tpu_custom_call.1']
    #allocation5 [shape = 'u8[8192]{0}', space=vmem, size = 0x2000, scoped, tag = 'output window, operand 0, single buffered']
    %6 = vsyncpa [#allocation3], 0
    %7 = vsyncpa [#allocation4], 0
    // Predicated region
    $region2: #{tpu_custom_call.1} parent=1 // pred_check
      _
    $region3: #{tpu_custom_call.1} parent=1 // pred_check_branch
      %9 = sbr.rel (0) target = $region5
    $region4: #{tpu_custom_call.1} parent=1 // pred_region
      %s11 = ssub.s32 256, 256
      %12 = vsyncadd [#allocation3], %s11
      %s13 = sshll.u32 [#allocation2], 4
      %s14 = int_to_ptr.vmem [resolvable:$true] %s13
      %19 = dma.hbm_to_vmem [thread:$0]  %s0, 256, %s14, [#allocation3], 128, 128, 8
    $region5: #{tpu_custom_call.1} parent=1 // pred_fallthru
      _
    // Predicated region
    $region6: #{tpu_custom_call.1} parent=1 // pred_check
      _
    $region7: #{tpu_custom_call.1} parent=1 // pred_check_branch
      %21 = sbr.rel (0) target = $region9
    $region8: #{tpu_custom_call.1} parent=1 // pred_region
      %22 = dma.done [#allocation3], 256
    $region9: #{tpu_custom_call.1} parent=1 // pred_fallthru
      _
    %v23 = vld [vmem:[#allocation2] sm:$0xff]
    %v24 = vld [vmem:[#allocation2 + $0x8] sm:$0xff]
    %v25 = vrot.slane %v23, 7
    %v26 = vrot.slane %v24, 7
    %27 = vst [vmem:[#allocation5] sm:$0xff] %v25
    %28 = vst [vmem:[#allocation5 + $0x8] sm:$0xff] %v26
    // Predicated region
    $region10: #{tpu_custom_call.1} parent=1 // pred_check
      _
    $region11: #{tpu_custom_call.1} parent=1 // pred_check_branch
      %30 = sbr.rel (0) target = $region13
    $region12: #{tpu_custom_call.1} parent=1 // pred_region
      %s32 = ssub.s32 256, 256
      %33 = vsyncadd [#allocation4], %s32
      %s34 = sshll.u32 [#allocation5], 4
      %s35 = int_to_ptr.vmem [resolvable:$true] %s34
      %40 = dma.vmem_to_hbm [thread:$0]  %s35, 256, %s1, [#allocation4], 128, 128, 8
    $region13: #{tpu_custom_call.1} parent=1 // pred_fallthru
      _
    // Predicated region
    $region14: #{tpu_custom_call.1} parent=1 // pred_check
      _
    $region15: #{tpu_custom_call.1} parent=1 // pred_check_branch
      %42 = sbr.rel (0) target = $region17
    $region16: #{tpu_custom_call.1} parent=1 // pred_region
      %43 = dma.done [#allocation4], 256
    $region17: #{tpu_custom_call.1} parent=1 // pred_fallthru
      _
    %44 = vsyncpa [#allocation3], 1
    %45 = vsyncpa [#allocation4], 1

// kernel: tpu_custom_call.1
$region0: #{tpu_custom_call.1}
  #allocation0 [shape = 'u32[]', space=smem, size = 0x4, offset = 0x4, fixed_abs, tag = 'smem constant byte address 0x4 - core index']
  #allocation1 [shape = 'u32[144,128]{1,0:T(1,128)}', space=vmem, size = 0x12000, scoped, tag = 'internal scratch']
  #allocation2 [shape = 'f32[10,32,128]{2,1,0:T(8,128)}', space=vmem, size = 0x28000, scoped, tag = 'scratch operand']
  %s0 = inlined_call_operand.vmem [shape: f32[2,18,16,4], index: 0, kind: input, shape index: {}]
  %s1 = inlined_call_operand.vmem [shape: f32[4,128], index: 1, kind: input, shape index: {}]
  %s2 = inlined_call_operand.vmem [shape: f32[1,128], index: 2, kind: input, shape index: {}]
  %s3 = inlined_call_operand.vmem [shape: f32[3,3,128], index: 3, kind: input, shape index: {}]
  %s4 = inlined_call_operand.vmem [shape: f32[1,128], index: 4, kind: input, shape index: {}]
  %s5 = inlined_call_operand.vmem [shape: f32[128,4], index: 5, kind: input, shape index: {}]
  %s6 = inlined_call_operand.vmem [shape: f32[1,4], index: 6, kind: input, shape index: {}]
  %s7 = inlined_call_operand.vmem [shape: f32[2,16,16,4], index: 7, kind: output, shape index: {}]
  %s8 = sld [smem:[#allocation0]]
  $region69: #{tpu_custom_call.1} parent=0
    _
  %s10 = ssub.s32 1, %s8
  %s11 = scalar_select 0, %s10, %s8
  loop: start=0, step=1, limit=6
  $region2: #{tpu_custom_call.1} parent=0 // loop_pre_header
    _
  $region3: #{tpu_custom_call.1} parent=0 // loop_header
    %s13 = sphi 0, %s17
    %p14 = scmp.ge.s32.totalorder %s13, 6
    %s20 = sphi 0, %s32
    %s21 = sphi 0, %s28
    %s22 = sphi 0, %s20
    %s23 = sphi 0, %s21
    %s24 = sphi 0, %s22
    %s25 = sphi 0, %s23
    %s35 = sphi 0, %s37
    %s38 = sphi 0, %s35
    %s39 = sphi 0, %s38
    %s55 = sphi 0, %s39
    %s59 = sphi 0, %s59
    %s61 = sphi 0, %s59
    %s62 = sphi 0, %s61
    %s76 = sphi 0, %s62
    %s80 = sphi 0, %s80
    %s82 = sphi 0, %s80
    %s83 = sphi 0, %s82
    %s97 = sphi 0, %s83
    %s101 = sphi 0, %s101
    %s103 = sphi 0, %s101
    %s104 = sphi 0, %s103
    %s118 = sphi 0, %s104
    %s122 = sphi 0, %s122
    %s124 = sphi 0, %s122
    %s125 = sphi 0, %s124
    %s139 = sphi 0, %s125
    %s143 = sphi 0, %s143
    %s145 = sphi 0, %s143
    %s146 = sphi 0, %s145
    %s160 = sphi 0, %s146
    %s164 = sphi 0, %s164
    %s166 = sphi 0, %s164
    %s167 = sphi 0, %s166
    %s181 = sphi 0, %s167
    %s189 = sphi 0, %s191
    %s192 = sphi 0, %s189
    %s193 = sphi 0, %s192
    %s209 = sphi 0, %s193
  $region4: #{tpu_custom_call.1} parent=0 // loop_header_branch
    %16 = sbr.rel (%p14) target = $region8
  $region5: #{tpu_custom_call.1} parent=0 // loop_body
    %s18 = ssub.s32 %s13, 1
    %s19 = ssub.s32 %s13, 2
    %s26 = sadd.s32 1, %s21
    %p27 = scmp.ge.s32.totalorder %s26, 2
    %s28 = scalar_select %p27, 0, %s26
    %s29 = sadd.s32 1, %s20
    %s30 = scalar_select %p27, %s29, %s20
    %p31 = scmp.ge.s32.totalorder %s30, 2
    %s32 = scalar_select %p31, 0, %s30
    %s33 = ssub.s32 %s20, %s32
    %p34 = scmp.eq.s32.totalorder %s33, 0
    %s36 = sadd.s32 %s35, 1
    %s37 = scalar_select %p34, %s35, %s36
    %p40 = pneg %p34
    %p41 = scmp.eq.s32.totalorder %s13, 3
    %p42 = por %p40, %p41
    %p43 = scmp.ne.s32.totalorder %s35, %s38
    %p44 = scmp.eq.s32.totalorder %s13, 0
    %p45 = por %p43, %p44
    %p46 = scmp.ne.s32.totalorder %s35, %s38
    %p47 = scmp.eq.s32.totalorder %s18, 3
    %p48 = por %p46, %p47
    %p49 = scmp.ne.s32.totalorder %s38, %s39
    %p50 = scmp.eq.s32.totalorder %s18, 0
    %p51 = por %p49, %p50
    %p52 = scmp.ne.s32.totalorder %s38, %s39
    %p53 = scmp.eq.s32.totalorder %s19, 3
    %p54 = por %p52, %p53
    %p56 = scmp.ne.s32.totalorder %s39, %s55
    %p57 = scmp.eq.s32.totalorder %s19, 0
    %p58 = por %p56, %p57
    %s60 = sadd.s32 %s59, 1
    %p63 = scmp.eq.s32.totalorder %s13, 3
    %p64 = scmp.ne.s32.totalorder %s59, %s61
    %p65 = scmp.eq.s32.totalorder %s13, 0
    %p66 = por %p64, %p65
    %p67 = scmp.ne.s32.totalorder %s59, %s61
    %p68 = scmp.eq.s32.totalorder %s18, 3
    %p69 = por %p67, %p68
    %p70 = scmp.ne.s32.totalorder %s61, %s62
    %p71 = scmp.eq.s32.totalorder %s18, 0
    %p72 = por %p70, %p71
    %p73 = scmp.ne.s32.totalorder %s61, %s62
    %p74 = scmp.eq.s32.totalorder %s19, 3
    %p75 = por %p73, %p74
    %p77 = scmp.ne.s32.totalorder %s62, %s76
    %p78 = scmp.eq.s32.totalorder %s19, 0
    %p79 = por %p77, %p78
    %s81 = sadd.s32 %s80, 1
    %p84 = scmp.eq.s32.totalorder %s13, 3
    %p85 = scmp.ne.s32.totalorder %s80, %s82
    %p86 = scmp.eq.s32.totalorder %s13, 0
    %p87 = por %p85, %p86
    %p88 = scmp.ne.s32.totalorder %s80, %s82
    %p89 = scmp.eq.s32.totalorder %s18, 3
    %p90 = por %p88, %p89
    %p91 = scmp.ne.s32.totalorder %s82, %s83
    %p92 = scmp.eq.s32.totalorder %s18, 0
    %p93 = por %p91, %p92
    %p94 = scmp.ne.s32.totalorder %s82, %s83
    %p95 = scmp.eq.s32.totalorder %s19, 3
    %p96 = por %p94, %p95
    %p98 = scmp.ne.s32.totalorder %s83, %s97
    %p99 = scmp.eq.s32.totalorder %s19, 0
    %p100 = por %p98, %p99
    %s102 = sadd.s32 %s101, 1
    %p105 = scmp.eq.s32.totalorder %s13, 3
    %p106 = scmp.ne.s32.totalorder %s101, %s103
    %p107 = scmp.eq.s32.totalorder %s13, 0
    %p108 = por %p106, %p107
    %p109 = scmp.ne.s32.totalorder %s101, %s103
    %p110 = scmp.eq.s32.totalorder %s18, 3
    %p111 = por %p109, %p110
    %p112 = scmp.ne.s32.totalorder %s103, %s104
    %p113 = scmp.eq.s32.totalorder %s18, 0
    %p114 = por %p112, %p113
    %p115 = scmp.ne.s32.totalorder %s103, %s104
    %p116 = scmp.eq.s32.totalorder %s19, 3
    %p117 = por %p115, %p116
    %p119 = scmp.ne.s32.totalorder %s104, %s118
    %p120 = scmp.eq.s32.totalorder %s19, 0
    %p121 = por %p119, %p120
    %s123 = sadd.s32 %s122, 1
    %p126 = scmp.eq.s32.totalorder %s13, 3
    %p127 = scmp.ne.s32.totalorder %s122, %s124
    %p128 = scmp.eq.s32.totalorder %s13, 0
    %p129 = por %p127, %p128
    %p130 = scmp.ne.s32.totalorder %s122, %s124
    %p131 = scmp.eq.s32.totalorder %s18, 3
    %p132 = por %p130, %p131
    %p133 = scmp.ne.s32.totalorder %s124, %s125
    %p134 = scmp.eq.s32.totalorder %s18, 0
    %p135 = por %p133, %p134
    %p136 = scmp.ne.s32.totalorder %s124, %s125
    %p137 = scmp.eq.s32.totalorder %s19, 3
    %p138 = por %p136, %p137
    %p140 = scmp.ne.s32.totalorder %s125, %s139
    %p141 = scmp.eq.s32.totalorder %s19, 0
    %p142 = por %p140, %p141
    %s144 = sadd.s32 %s143, 1
    %p147 = scmp.eq.s32.totalorder %s13, 3
    %p148 = scmp.ne.s32.totalorder %s143, %s145
    %p149 = scmp.eq.s32.totalorder %s13, 0
    %p150 = por %p148, %p149
    %p151 = scmp.ne.s32.totalorder %s143, %s145
    %p152 = scmp.eq.s32.totalorder %s18, 3
    %p153 = por %p151, %p152
    %p154 = scmp.ne.s32.totalorder %s145, %s146
    %p155 = scmp.eq.s32.totalorder %s18, 0
    %p156 = por %p154, %p155
    %p157 = scmp.ne.s32.totalorder %s145, %s146
    %p158 = scmp.eq.s32.totalorder %s19, 3
    %p159 = por %p157, %p158
    %p161 = scmp.ne.s32.totalorder %s146, %s160
    %p162 = scmp.eq.s32.totalorder %s19, 0
    %p163 = por %p161, %p162
    %s165 = sadd.s32 %s164, 1
    %p168 = scmp.eq.s32.totalorder %s13, 3
    %p169 = scmp.ne.s32.totalorder %s164, %s166
    %p170 = scmp.eq.s32.totalorder %s13, 0
    %p171 = por %p169, %p170
    %p172 = scmp.ne.s32.totalorder %s164, %s166
    %p173 = scmp.eq.s32.totalorder %s18, 3
    %p174 = por %p172, %p173
    %p175 = scmp.ne.s32.totalorder %s166, %s167
    %p176 = scmp.eq.s32.totalorder %s18, 0
    %p177 = por %p175, %p176
    %p178 = scmp.ne.s32.totalorder %s166, %s167
    %p179 = scmp.eq.s32.totalorder %s19, 3
    %p180 = por %p178, %p179
    %p182 = scmp.ne.s32.totalorder %s167, %s181
    %p183 = scmp.eq.s32.totalorder %s19, 0
    %p184 = por %p182, %p183
    %s185 = ssub.s32 %s20, %s32
    %s186 = ssub.s32 %s21, %s28
    %s187 = sor.u32 %s185, %s186
    %p188 = scmp.eq.s32.totalorder %s187, 0
    %s190 = sadd.s32 %s189, 1
    %s191 = scalar_select %p188, %s189, %s190
    %p194 = pneg %p188
    %p195 = scmp.eq.s32.totalorder %s13, 3
    %p196 = por %p194, %p195
    %p197 = scmp.ne.s32.totalorder %s189, %s192
    %p198 = scmp.eq.s32.totalorder %s13, 0
    %p199 = por %p197, %p198
    %p200 = scmp.ne.s32.totalorder %s189, %s192
    %p201 = scmp.eq.s32.totalorder %s18, 3
    %p202 = por %p200, %p201
    %p203 = scmp.ne.s32.totalorder %s192, %s193
    %p204 = scmp.eq.s32.totalorder %s18, 0
    %p205 = por %p203, %p204
    %p206 = scmp.ne.s32.totalorder %s192, %s193
    %p207 = scmp.eq.s32.totalorder %s19, 3
    %p208 = por %p206, %p207
    %p210 = scmp.ne.s32.totalorder %s193, %s209
    %p211 = scmp.eq.s32.totalorder %s19, 0
    %p212 = por %p210, %p211
    %p213 = scmp.le.s32.totalorder 1, %s13
    %p214 = scmp.lt.s32.totalorder %s13, 5
    %p215 = pnand %p213, %p214
    %p216 = pneg %p215
    // Predicated region
    $region9: #{tpu_custom_call.1} parent=5 // pred_check
      _
    $region10: #{tpu_custom_call.1} parent=5 // pred_check_branch
      %218 = sbr.rel (%p215) target = $region12
    $region11: #{tpu_custom_call.1} parent=5 // pred_region
      %s219 = ssub.s32 %s13, 1
      // Predicated region
      $region13: #{tpu_custom_call.1} parent=11 // pred_check
        %p220 = pneg %p72
      $region14: #{tpu_custom_call.1} parent=11 // pred_check_branch
        %222 = sbr.rel (%p220) target = $region16
      $region15: #{tpu_custom_call.1} parent=11 // pred_region
        _
      $region16: #{tpu_custom_call.1} parent=11 // pred_fallthru
        _
      // Predicated region
      $region17: #{tpu_custom_call.1} parent=11 // pred_check
        %p223 = pneg %p93
      $region18: #{tpu_custom_call.1} parent=11 // pred_check_branch
        %225 = sbr.rel (%p223) target = $region20
      $region19: #{tpu_custom_call.1} parent=11 // pred_region
        _
      $region20: #{tpu_custom_call.1} parent=11 // pred_fallthru
        _
      // Predicated region
      $region21: #{tpu_custom_call.1} parent=11 // pred_check
        %p226 = pneg %p114
      $region22: #{tpu_custom_call.1} parent=11 // pred_check_branch
        %228 = sbr.rel (%p226) target = $region24
      $region23: #{tpu_custom_call.1} parent=11 // pred_region
        _
      $region24: #{tpu_custom_call.1} parent=11 // pred_fallthru
        _
      // Predicated region
      $region25: #{tpu_custom_call.1} parent=11 // pred_check
        %p229 = pneg %p135
      $region26: #{tpu_custom_call.1} parent=11 // pred_check_branch
        %231 = sbr.rel (%p229) target = $region28
      $region27: #{tpu_custom_call.1} parent=11 // pred_region
        _
      $region28: #{tpu_custom_call.1} parent=11 // pred_fallthru
        _
      // Predicated region
      $region29: #{tpu_custom_call.1} parent=11 // pred_check
        %p232 = pneg %p156
      $region30: #{tpu_custom_call.1} parent=11 // pred_check_branch
        %234 = sbr.rel (%p232) target = $region32
      $region31: #{tpu_custom_call.1} parent=11 // pred_region
        _
      $region32: #{tpu_custom_call.1} parent=11 // pred_fallthru
        _
      // Predicated region
      $region33: #{tpu_custom_call.1} parent=11 // pred_check
        %p235 = pneg %p177
      $region34: #{tpu_custom_call.1} parent=11 // pred_check_branch
        %237 = sbr.rel (%p235) target = $region36
      $region35: #{tpu_custom_call.1} parent=11 // pred_region
        _
      $region36: #{tpu_custom_call.1} parent=11 // pred_fallthru
        _
    $region12: #{tpu_custom_call.1} parent=5 // pred_fallthru
      _
    %p238 = scmp.lt.s32.totalorder %s13, 4
    // Predicated region
    $region37: #{tpu_custom_call.1} parent=5 // pred_check
      %p239 = pneg %p238
    $region38: #{tpu_custom_call.1} parent=5 // pred_check_branch
      %241 = sbr.rel (%p239) target = $region40
    $region39: #{tpu_custom_call.1} parent=5 // pred_region
      // Predicated region
      $region41: #{tpu_custom_call.1} parent=39 // pred_check
        %p242 = pneg %p45
      $region42: #{tpu_custom_call.1} parent=39 // pred_check_branch
        %244 = sbr.rel (%p242) target = $region44
      $region43: #{tpu_custom_call.1} parent=39 // pred_region
        %p245 = scmp.lt.s32.totalorder %s20, 1
        %s246 = scalar_select %p245, %s20, 1
        %s247 = smul.addr %s246, 36
        %s248 = smul.addr %s247, 8
        %s249 = scalar_lea.vmem %s0, %s248
      $region44: #{tpu_custom_call.1} parent=39 // pred_fallthru
        _
    $region40: #{tpu_custom_call.1} parent=5 // pred_fallthru
      _
    %p250 = scmp.le.s32.totalorder 1, %s13
    %p251 = scmp.lt.s32.totalorder %s13, 5
    %p252 = pnand %p250, %p251
    %p253 = pneg %p252
    // Predicated region
    $region45: #{tpu_custom_call.1} parent=5 // pred_check
      _
    $region46: #{tpu_custom_call.1} parent=5 // pred_check_branch
      %255 = sbr.rel (%p252) target = $region48
    $region47: #{tpu_custom_call.1} parent=5 // pred_region
      %s256 = ssub.s32 %s13, 1
      %p257 = scmp.lt.s32.totalorder %s22, 1
      %s258 = scalar_select %p257, %s22, 1
      %s259 = smul.addr %s258, 36
      %s260 = smul.addr %s259, 8
      %s261 = scalar_lea.vmem %s0, %s260
      %p262 = pneg %p51
      %p263 = pneg %p48
      %p264 = pneg %p72
      %p265 = pneg %p69
      %p266 = pneg %p93
      %p267 = pneg %p90
      %p268 = pneg %p114
      %p269 = pneg %p111
      %p270 = pneg %p135
      %p271 = pneg %p132
      %p272 = pneg %p156
      %p273 = pneg %p153
      %p274 = pneg %p177
      %p275 = pneg %p174
      %p276 = pneg %p205
      %p277 = pneg %p202
      %s278 = smul.u32 8, %s23
      %p279 = scmp.lt.s32.totalorder %s22, 1
      %s280 = scalar_select %p279, %s22, 1
      %p281 = scmp.lt.s32.totalorder %s278, 15
      %s282 = scalar_select %p281, %s278, 15
      %s283 = smul.addr %s282, 2
      %s284 = smul.addr %s280, 32
      %s285 = sadd.s32 %s283, %s284
      %s286 = smul.addr %s285, 8
      %s287 = scalar_lea.vmem %s7, %s286
      %p288 = scmp.lt.s32.totalorder %s22, 1
      %s289 = scalar_select %p288, %s22, 1
      %s290 = smul.addr %s289, 36
      %s291 = smul.addr %s290, 8
      %s292 = scalar_lea.vmem %s0, %s291
      %s293 = smul.u32 8, %s23
      %p294 = scmp.lt.s32.totalorder %s22, 1
      %s295 = scalar_select %p294, %s22, 1
      %p296 = scmp.lt.s32.totalorder %s293, 15
      %s297 = scalar_select %p296, %s293, 15
      %s298 = smul.addr %s297, 2
      %s299 = smul.addr %s295, 32
      %s300 = sadd.s32 %s298, %s299
      %s301 = smul.addr %s300, 8
      %s302 = scalar_lea.vmem %s7, %s301
      %s303 = smul.u32 8, %s23
      %304 = vst [vmem:[#allocation2 + $0x7] sm:$0x1] 0.0
      %305 = vst [vmem:[#allocation2 + $0x27] sm:$0x1] 0.0
      %306 = vst [vmem:[#allocation2 + $0x47] sm:$0x1] 0.0
      %307 = vst [vmem:[#allocation2 + $0x67] sm:$0x1] 0.0
      %308 = vst [vmem:[#allocation2 + $0x87] sm:$0x1] 0.0
      %309 = vst [vmem:[#allocation2 + $0xa7] sm:$0x1] 0.0
      %310 = vst [vmem:[#allocation2 + $0xc7] sm:$0x1] 0.0
      %311 = vst [vmem:[#allocation2 + $0xe7] sm:$0x1] 0.0
      %312 = vst [vmem:[#allocation2 + $0x107] sm:$0x1] 0.0
      %313 = vst [vmem:[#allocation2 + $0x127] sm:$0x1] 0.0
      %314 = vst [vmem:[#allocation2 + $0x18] sm:$0x1] 0.0
      %315 = vst [vmem:[#allocation2 + $0x38] sm:$0x1] 0.0
      %316 = vst [vmem:[#allocation2 + $0x58] sm:$0x1] 0.0
      %317 = vst [vmem:[#allocation2 + $0x78] sm:$0x1] 0.0
      %318 = vst [vmem:[#allocation2 + $0x98] sm:$0x1] 0.0
      %319 = vst [vmem:[#allocation2 + $0xb8] sm:$0x1] 0.0
      %320 = vst [vmem:[#allocation2 + $0xd8] sm:$0x1] 0.0
      %321 = vst [vmem:[#allocation2 + $0xf8] sm:$0x1] 0.0
      %322 = vst [vmem:[#allocation2 + $0x118] sm:$0x1] 0.0
      %323 = vst [vmem:[#allocation2 + $0x138] sm:$0x1] 0.0
      %s324 = smul.u32 %s23, 8
      %s325 = smul.u32 %s324, 16
      %s326 = scalar_lea.vmem %s292, %s325
      %v327 = vld [vmem:[%s326] sm:$0xff]
      %v328 = vld [vmem:[%s326 + $0x8] sm:$0xff]
      %v329 = vld [vmem:[%s326 + $0x10] sm:$0xff]
      %v330 = vld [vmem:[%s326 + $0x18] sm:$0xff]
      %v331 = vld [vmem:[%s326 + $0x20] sm:$0xff]
      %v332 = vld [vmem:[%s326 + $0x28] sm:$0xff]
      %v333 = vld [vmem:[%s326 + $0x30] sm:$0xff]
      %v334 = vld [vmem:[%s326 + $0x38] sm:$0xff]
      %v335 = vld [vmem:[%s326 + $0x40] sm:$0xff]
      %v336 = vld [vmem:[%s326 + $0x48] sm:$0xff]
      %v337 = vld [vmem:[%s326 + $0x50] sm:$0xff]
      %v338 = vld [vmem:[%s326 + $0x58] sm:$0xff]
      %v339 = vld [vmem:[%s326 + $0x60] sm:$0xff]
      %v340 = vld [vmem:[%s326 + $0x68] sm:$0xff]
      %v341 = vld [vmem:[%s326 + $0x70] sm:$0xff]
      %v342 = vld [vmem:[%s326 + $0x78] sm:$0xff]
      %v343 = vld [vmem:[%s326 + $0x80] sm:$0xff]
      %v344 = vld [vmem:[%s326 + $0x88] sm:$0xff]
      %v345 = vld [vmem:[%s326 + $0x90] sm:$0xff]
      %v346 = vld [vmem:[%s326 + $0x98] sm:$0xff]
      %v347 = vld [vmem:[%s1] sm:$0xf]
      %v348 = vld [vmem:[%s2] sm:$0x1]
      %v350 = vlaneseq
      %v351 = vshrl.u32 %v350, 7
      %v352 = vsub.s32 0, %v351
      %v353 = vrot.slane %v348, %v352
      %vm355 = vcmask 31744
      %v357 = vsel %vm355, %v327, 0
      %v360 = vsel %vm355, %v328, 0
      %v363 = vsel %vm355, %v329, 0
      %v366 = vsel %vm355, %v330, 0
      %v369 = vsel %vm355, %v331, 0
      %v372 = vsel %vm355, %v332, 0
      %v375 = vsel %vm355, %v333, 0
      %v378 = vsel %vm355, %v334, 0
      %v381 = vsel %vm355, %v335, 0
      %v384 = vsel %vm355, %v336, 0
      %v387 = vsel %vm355, %v337, 0
      %v390 = vsel %vm355, %v338, 0
      %v393 = vsel %vm355, %v339, 0
      %v396 = vsel %vm355, %v340, 0
      %v399 = vsel %vm355, %v341, 0
      %v402 = vsel %vm355, %v342, 0
      %v405 = vsel %vm355, %v343, 0
      %v408 = vsel %vm355, %v344, 0
      %v411 = vsel %vm355, %v345, 0
      %v414 = vsel %vm355, %v346, 0
      %vm416 = vcmask 1043456
      %v418 = vsel %vm416, %v347, 0
      %420 = vmatprep.subr.mxu0 0.0
      %421 = vmatpush1.msra.mxu0 %v418
      %422 = vmatprep.subr.mxu0 0.0
      %423 = vmatpush1.msra.mxu0 0.0
      %424 = vmatprep.subr.mxu0 0.0
      %425 = vmatpush1.msra.mxu0 0.0
      %426 = vmatprep.subr.mxu0 0.0
      %427 = vmatpush1.msra.mxu0 0.0
      %428 = vmatprep.subr.mxu0 0.0
      %429 = vmatpush1.msra.mxu0 0.0
      %430 = vmatprep.subr.mxu0 0.0
      %431 = vmatpush1.msra.mxu0 0.0
      %432 = vmatprep.subr.mxu0 0.0
      %433 = vmatpush1.msra.mxu0 0.0
      %434 = vmatprep.subr.mxu0 0.0
      %435 = vmatpush1.msra.mxu0 0.0
      %436 = vmatprep.subr.mxu0 0.0
      %437 = vmatpush1.msra.mxu0 0.0
      %438 = vmatprep.subr.mxu0 0.0
      %439 = vmatpush1.msra.mxu0 0.0
      %440 = vmatprep.subr.mxu0 0.0
      %441 = vmatpush1.msra.mxu0 0.0
      %442 = vmatprep.subr.mxu0 0.0
      %443 = vmatpush1.msra.mxu0 0.0
      %444 = vmatprep.subr.mxu0 0.0
      %445 = vmatpush1.msra.mxu0 0.0
      %446 = vmatprep.subr.mxu0 0.0
      %447 = vmatpush1.msra.mxu0 0.0
      %448 = vmatprep.subr.mxu0 0.0
      %449 = vmatpush1.msra.mxu0 0.0
      %450 = vmatprep.subr.mxu0 0.0
      %451 = vmatpush1.msra.mxu0 0.0
      %452 = vmatprep.subr.mxu0 0.0
      %453 = vmatpush1.msra.mxu0 0.0
      %454 = vmatprep.subr.mxu0 0.0
      %455 = vmatpush1.msra.mxu0 0.0
      %456 = vmatprep.subr.mxu0 0.0
      %457 = vmatpush1.msra.mxu0 0.0
      %458 = vmatprep.subr.mxu0 0.0
      %459 = vmatpush1.msra.mxu0 0.0
      %460 = vmatprep.subr.mxu0 0.0
      %461 = vmatpush1.msra.mxu0 0.0
      %462 = vmatprep.subr.mxu0 0.0
      %463 = vmatpush1.msra.mxu0 0.0
      %464 = vmatprep.subr.mxu0 0.0
      %465 = vmatpush1.msra.mxu0 0.0
      %466 = vmatprep.subr.mxu0 0.0
      %467 = vmatpush1.msra.mxu0 0.0
      %468 = vmatprep.subr.mxu0 0.0
      %469 = vmatpush1.msra.mxu0 0.0
      %470 = vmatprep.subr.mxu0 0.0
      %471 = vmatpush1.msra.mxu0 0.0
      %472 = vmatprep.subr.mxu0 0.0
      %473 = vmatpush1.msra.mxu0 0.0
      %474 = vmatprep.subr.mxu0 0.0
      %475 = vmatpush1.msra.mxu0 0.0
      %476 = vmatprep.subr.mxu0 0.0
      %477 = vmatpush1.msra.mxu0 0.0
      %478 = vmatprep.subr.mxu0 0.0
      %479 = vmatpush1.msra.mxu0 0.0
      %480 = vmatprep.subr.mxu0 0.0
      %481 = vmatpush1.msra.mxu0 0.0
      %482 = vmatprep.subr.mxu0 0.0
      %483 = vmatpush1.msra.mxu0 0.0
      %484 = vmatprep.mubr.f32.mxu0 0.0
      %485 = vmatmul.mubr.f32.gmra.mrb[0].mxu0 %v357
      %v486 = vpop.f32.mrb[0].mxu0
      %v487 = vadd.f32 %v353, %v486
      %v488 = vpop.f32.mrb[0].mxu0
      %489 = vmatprep.mubr.f32.mxu0 0.0
      %490 = vmatmul.mubr.f32.gmra.mrb[0].mxu0 %v360
      %v491 = vpop.f32.mrb[0].mxu0
      %v492 = vadd.f32 %v353, %v491
      %v493 = vpop.f32.mrb[0].mxu0
      %494 = vmatprep.mubr.f32.mxu0 0.0
      %495 = vmatmul.mubr.f32.gmra.mrb[0].mxu0 %v363
      %v496 = vpop.f32.mrb[0].mxu0
      %v497 = vadd.f32 %v353, %v496
      %v498 = vpop.f32.mrb[0].mxu0
      %499 = vmatprep.mubr.f32.mxu0 0.0
      %500 = vmatmul.mubr.f32.gmra.mrb[0].mxu0 %v366
      %v501 = vpop.f32.mrb[0].mxu0
      %v502 = vadd.f32 %v353, %v501
      %v503 = vpop.f32.mrb[0].mxu0
      %504 = vmatprep.mubr.f32.mxu0 0.0
      %505 = vmatmul.mubr.f32.gmra.mrb[0].mxu0 %v369
      %v506 = vpop.f32.mrb[0].mxu0
      %v507 = vadd.f32 %v353, %v506
      %v508 = vpop.f32.mrb[0].mxu0
      %509 = vmatprep.mubr.f32.mxu0 0.0
      %510 = vmatmul.mubr.f32.gmra.mrb[0].mxu0 %v372
      %v511 = vpop.f32.mrb[0].mxu0
      %v512 = vadd.f32 %v353, %v511
      %v513 = vpop.f32.mrb[0].mxu0
      %514 = vmatprep.mubr.f32.mxu0 0.0
      %515 = vmatmul.mubr.f32.gmra.mrb[0].mxu0 %v375
      %v516 = vpop.f32.mrb[0].mxu0
      %v517 = vadd.f32 %v353, %v516
      %v518 = vpop.f32.mrb[0].mxu0
      %519 = vmatprep.mubr.f32.mxu0 0.0
      %520 = vmatmul.mubr.f32.gmra.mrb[0].mxu0 %v378
      %v521 = vpop.f32.mrb[0].mxu0
      %v522 = vadd.f32 %v353, %v521
      %v523 = vpop.f32.mrb[0].mxu0
      %524 = vmatprep.mubr.f32.mxu0 0.0
      %525 = vmatmul.mubr.f32.gmra.mrb[0].mxu0 %v381
      %v526 = vpop.f32.mrb[0].mxu0
      %v527 = vadd.f32 %v353, %v526
      %v528 = vpop.f32.mrb[0].mxu0
      %529 = vmatprep.mubr.f32.mxu0 0.0
      %530 = vmatmul.mubr.f32.gmra.mrb[0].mxu0 %v384
      %v531 = vpop.f32.mrb[0].mxu0
      %v532 = vadd.f32 %v353, %v531
      %v533 = vpop.f32.mrb[0].mxu0
      %534 = vmatprep.mubr.f32.mxu0 0.0
      %535 = vmatmul.mubr.f32.gmra.mrb[0].mxu0 %v387
      %v536 = vpop.f32.mrb[0].mxu0
      %v537 = vadd.f32 %v353, %v536
      %v538 = vpop.f32.mrb[0].mxu0
      %539 = vmatprep.mubr.f32.mxu0 0.0
      %540 = vmatmul.mubr.f32.gmra.mrb[0].mxu0 %v390
      %v541 = vpop.f32.mrb[0].mxu0
      %v542 = vadd.f32 %v353, %v541
      %v543 = vpop.f32.mrb[0].mxu0
      %544 = vmatprep.mubr.f32.mxu0 0.0
      %545 = vmatmul.mubr.f32.gmra.mrb[0].mxu0 %v393
      %v546 = vpop.f32.mrb[0].mxu0
      %v547 = vadd.f32 %v353, %v546
      %v548 = vpop.f32.mrb[0].mxu0
      %549 = vmatprep.mubr.f32.mxu0 0.0
      %550 = vmatmul.mubr.f32.gmra.mrb[0].mxu0 %v396
      %v551 = vpop.f32.mrb[0].mxu0
      %v552 = vadd.f32 %v353, %v551
      %v553 = vpop.f32.mrb[0].mxu0
      %554 = vmatprep.mubr.f32.mxu0 0.0
      %555 = vmatmul.mubr.f32.gmra.mrb[0].mxu0 %v399
      %v556 = vpop.f32.mrb[0].mxu0
      %v557 = vadd.f32 %v353, %v556
      %v558 = vpop.f32.mrb[0].mxu0
      %559 = vmatprep.mubr.f32.mxu0 0.0
      %560 = vmatmul.mubr.f32.gmra.mrb[0].mxu0 %v402
      %v561 = vpop.f32.mrb[0].mxu0
      %v562 = vadd.f32 %v353, %v561
      %v563 = vpop.f32.mrb[0].mxu0
      %564 = vmatprep.mubr.f32.mxu0 0.0
      %565 = vmatmul.mubr.f32.gmra.mrb[0].mxu0 %v405
      %v566 = vpop.f32.mrb[0].mxu0
      %v567 = vadd.f32 %v353, %v566
      %v568 = vpop.f32.mrb[0].mxu0
      %569 = vmatprep.mubr.f32.mxu0 0.0
      %570 = vmatmul.mubr.f32.gmra.mrb[0].mxu0 %v408
      %v571 = vpop.f32.mrb[0].mxu0
      %v572 = vadd.f32 %v353, %v571
      %v573 = vpop.f32.mrb[0].mxu0
      %574 = vmatprep.mubr.f32.mxu0 0.0
      %575 = vmatmul.mubr.f32.gmra.mrb[0].mxu0 %v411
      %v576 = vpop.f32.mrb[0].mxu0
      %v577 = vadd.f32 %v353, %v576
      %v578 = vpop.f32.mrb[0].mxu0
      %579 = vmatprep.mubr.f32.mxu0 0.0
      %580 = vmatmul.mubr.f32.gmra.mrb[0].mxu0 %v414
      %v581 = vpop.f32.mrb[0].mxu0
      %v582 = vadd.f32 %v353, %v581
      %v583 = vpop.f32.mrb[0].mxu0
      %584 = vdwg.mxu0
      %v585 = vmax.f32 %v487, 0.0
      %v586 = vmax.f32 %v492, 0.0
      %v587 = vmax.f32 %v497, 0.0
      %v588 = vmax.f32 %v502, 0.0
      %v589 = vmax.f32 %v507, 0.0
      %v590 = vmax.f32 %v512, 0.0
      %v591 = vmax.f32 %v517, 0.0
      %v592 = vmax.f32 %v522, 0.0
      %v593 = vmax.f32 %v527, 0.0
      %v594 = vmax.f32 %v532, 0.0
      %v595 = vmax.f32 %v537, 0.0
      %v596 = vmax.f32 %v542, 0.0
      %v597 = vmax.f32 %v547, 0.0
      %v598 = vmax.f32 %v552, 0.0
      %v599 = vmax.f32 %v557, 0.0
      %v600 = vmax.f32 %v562, 0.0
      %v601 = vmax.f32 %v567, 0.0
      %v602 = vmax.f32 %v572, 0.0
      %v603 = vmax.f32 %v577, 0.0
      %v604 = vmax.f32 %v582, 0.0
      %v605 = vmin.f32 %v585, 6.0
      %v606 = vmin.f32 %v586, 6.0
      %v607 = vmin.f32 %v587, 6.0
      %v608 = vmin.f32 %v588, 6.0
      %v609 = vmin.f32 %v589, 6.0
      %v610 = vmin.f32 %v590, 6.0
      %v611 = vmin.f32 %v591, 6.0
      %v612 = vmin.f32 %v592, 6.0
      %v613 = vmin.f32 %v593, 6.0
      %v614 = vmin.f32 %v594, 6.0
      %v615 = vmin.f32 %v595, 6.0
      %v616 = vmin.f32 %v596, 6.0
      %v617 = vmin.f32 %v597, 6.0
      %v618 = vmin.f32 %v598, 6.0
      %v619 = vmin.f32 %v599, 6.0
      %v620 = vmin.f32 %v600, 6.0
      %v621 = vmin.f32 %v601, 6.0
      %v622 = vmin.f32 %v602, 6.0
      %v623 = vmin.f32 %v603, 6.0
      %v624 = vmin.f32 %v604, 6.0
      %625 = vst [vmem:[#allocation2 + $0x8] sm:$0xff] %v605
      %626 = vst [vmem:[#allocation2 + $0x10] sm:$0xff] %v606
      %627 = vst [vmem:[#allocation2 + $0x28] sm:$0xff] %v607
      %628 = vst [vmem:[#allocation2 + $0x30] sm:$0xff] %v608
      %629 = vst [vmem:[#allocation2 + $0x48] sm:$0xff] %v609
      %630 = vst [vmem:[#allocation2 + $0x50] sm:$0xff] %v610
      %631 = vst [vmem:[#allocation2 + $0x68] sm:$0xff] %v611
      %632 = vst [vmem:[#allocation2 + $0x70] sm:$0xff] %v612
      %633 = vst [vmem:[#allocation2 + $0x88] sm:$0xff] %v613
      %634 = vst [vmem:[#allocation2 + $0x90] sm:$0xff] %v614
      %635 = vst [vmem:[#allocation2 + $0xa8] sm:$0xff] %v615
      %636 = vst [vmem:[#allocation2 + $0xb0] sm:$0xff] %v616
      %637 = vst [vmem:[#allocation2 + $0xc8] sm:$0xff] %v617
      %638 = vst [vmem:[#allocation2 + $0xd0] sm:$0xff] %v618
      %639 = vst [vmem:[#allocation2 + $0xe8] sm:$0xff] %v619
      %640 = vst [vmem:[#allocation2 + $0xf0] sm:$0xff] %v620
      %641 = vst [vmem:[#allocation2 + $0x108] sm:$0xff] %v621
      %642 = vst [vmem:[#allocation2 + $0x110] sm:$0xff] %v622
      %643 = vst [vmem:[#allocation2 + $0x128] sm:$0xff] %v623
      %644 = vst [vmem:[#allocation2 + $0x130] sm:$0xff] %v624
      %p645 = scmp.eq.s32.totalorder %s23, 0
      // Predicated region
      $region49: #{tpu_custom_call.1} parent=47 // pred_check
        %p646 = pneg %p645
      $region50: #{tpu_custom_call.1} parent=47 // pred_check_branch
        %648 = sbr.rel (%p646) target = $region52
      $region51: #{tpu_custom_call.1} parent=47 // pred_region
        %649 = vst [vmem:[#allocation2] sm:$0xff] 0.0
        %650 = vst [vmem:[#allocation2 + $0x8] sm:$0xff] 0.0
        %651 = vst [vmem:[#allocation2 + $0x10] sm:$0xff] 0.0
        %652 = vst [vmem:[#allocation2 + $0x18] sm:$0xff] 0.0
      $region52: #{tpu_custom_call.1} parent=47 // pred_fallthru
        _
      %p653 = scmp.eq.s32.totalorder %s23, 1
      // Predicated region
      $region53: #{tpu_custom_call.1} parent=47 // pred_check
        %p654 = pneg %p653
      $region54: #{tpu_custom_call.1} parent=47 // pred_check_branch
        %656 = sbr.rel (%p654) target = $region56
      $region55: #{tpu_custom_call.1} parent=47 // pred_region
        %s657 = scalar_lea.vmem [#allocation2], 288
        %658 = vst [vmem:[%s657] sm:$0xff] 0.0
        %659 = vst [vmem:[%s657 + $0x8] sm:$0xff] 0.0
        %660 = vst [vmem:[%s657 + $0x10] sm:$0xff] 0.0
        %661 = vst [vmem:[%s657 + $0x18] sm:$0xff] 0.0
      $region56: #{tpu_custom_call.1} parent=47 // pred_fallthru
        _
      %v662 = vld [vmem:[#allocation2 + $0x7] sm:$0xff]
      %v663 = vld [vmem:[#allocation2 + $0xf] sm:$0xff]
      %v664 = vld [vmem:[#allocation2 + $0x27] sm:$0xff]
      %v665 = vld [vmem:[#allocation2 + $0x2f] sm:$0xff]
      %v666 = vld [vmem:[#allocation2 + $0x47] sm:$0xff]
      %v667 = vld [vmem:[#allocation2 + $0x4f] sm:$0xff]
      %v668 = vld [vmem:[#allocation2 + $0x67] sm:$0xff]
      %v669 = vld [vmem:[#allocation2 + $0x6f] sm:$0xff]
      %v670 = vld [vmem:[#allocation2 + $0x87] sm:$0xff]
      %v671 = vld [vmem:[#allocation2 + $0x8f] sm:$0xff]
      %v672 = vld [vmem:[#allocation2 + $0xa7] sm:$0xff]
      %v673 = vld [vmem:[#allocation2 + $0xaf] sm:$0xff]
      %v674 = vld [vmem:[#allocation2 + $0xc7] sm:$0xff]
      %v675 = vld [vmem:[#allocation2 + $0xcf] sm:$0xff]
      %v676 = vld [vmem:[#allocation2 + $0xe7] sm:$0xff]
      %v677 = vld [vmem:[#allocation2 + $0xef] sm:$0xff]
      %v678 = vld [vmem:[#allocation2 + $0x8] sm:$0xff]
      %v679 = vld [vmem:[#allocation2 + $0x10] sm:$0xff]
      %v680 = vld [vmem:[#allocation2 + $0x28] sm:$0xff]
      %v681 = vld [vmem:[#allocation2 + $0x30] sm:$0xff]
      %v682 = vld [vmem:[#allocation2 + $0x48] sm:$0xff]
      %v683 = vld [vmem:[#allocation2 + $0x50] sm:$0xff]
      %v684 = vld [vmem:[#allocation2 + $0x68] sm:$0xff]
      %v685 = vld [vmem:[#allocation2 + $0x70] sm:$0xff]
      %v686 = vld [vmem:[#allocation2 + $0x88] sm:$0xff]
      %v687 = vld [vmem:[#allocation2 + $0x90] sm:$0xff]
      %v688 = vld [vmem:[#allocation2 + $0xa8] sm:$0xff]
      %v689 = vld [vmem:[#allocation2 + $0xb0] sm:$0xff]
      %v690 = vld [vmem:[#allocation2 + $0xc8] sm:$0xff]
      %v691 = vld [vmem:[#allocation2 + $0xd0] sm:$0xff]
      %v692 = vld [vmem:[#allocation2 + $0xe8] sm:$0xff]
      %v693 = vld [vmem:[#allocation2 + $0xf0] sm:$0xff]
      %v694 = vld [vmem:[#allocation2 + $0x9] sm:$0xff]
      %v695 = vld [vmem:[#allocation2 + $0x11] sm:$0xff]
      %v696 = vld [vmem:[#allocation2 + $0x29] sm:$0xff]
      %v697 = vld [vmem:[#allocation2 + $0x31] sm:$0xff]
      %v698 = vld [vmem:[#allocation2 + $0x49] sm:$0xff]
      %v699 = vld [vmem:[#allocation2 + $0x51] sm:$0xff]
      %v700 = vld [vmem:[#allocation2 + $0x69] sm:$0xff]
      %v701 = vld [vmem:[#allocation2 + $0x71] sm:$0xff]
      %v702 = vld [vmem:[#allocation2 + $0x89] sm:$0xff]
      %v703 = vld [vmem:[#allocation2 + $0x91] sm:$0xff]
      %v704 = vld [vmem:[#allocation2 + $0xa9] sm:$0xff]
      %v705 = vld [vmem:[#allocation2 + $0xb1] sm:$0xff]
      %v706 = vld [vmem:[#allocation2 + $0xc9] sm:$0xff]
      %v707 = vld [vmem:[#allocation2 + $0xd1] sm:$0xff]
      %v708 = vld [vmem:[#allocation2 + $0xe9] sm:$0xff]
      %v709 = vld [vmem:[#allocation2 + $0xf1] sm:$0xff]
      %v710 = vld [vmem:[%s3] sm:$0x1]
      %v711 = vlaneseq
      %v712 = vshrl.u32 %v711, 7
      %v713 = vsub.s32 0, %v712
      %v714 = vrot.slane %v710, %v713
      %v715 = vmul.f32 %v662, %v714
      %v716 = vmul.f32 %v663, %v714
      %v717 = vmul.f32 %v664, %v714
      %v718 = vmul.f32 %v665, %v714
      %v719 = vmul.f32 %v666, %v714
      %v720 = vmul.f32 %v667, %v714
      %v721 = vmul.f32 %v668, %v714
      %v722 = vmul.f32 %v669, %v714
      %v723 = vmul.f32 %v670, %v714
      %v724 = vmul.f32 %v671, %v714
      %v725 = vmul.f32 %v672, %v714
      %v726 = vmul.f32 %v673, %v714
      %v727 = vmul.f32 %v674, %v714
      %v728 = vmul.f32 %v675, %v714
      %v729 = vmul.f32 %v676, %v714
      %v730 = vmul.f32 %v677, %v714
      %v731 = vld [vmem:[%s3 + $0x1] sm:$0x1]
      %v732 = vlaneseq
      %v733 = vshrl.u32 %v732, 7
      %v734 = vsub.s32 0, %v733
      %v735 = vrot.slane %v731, %v734
      %v736 = vmul.f32 %v678, %v735
      %v737 = vmul.f32 %v679, %v735
      %v738 = vmul.f32 %v680, %v735
      %v739 = vmul.f32 %v681, %v735
      %v740 = vmul.f32 %v682, %v735
      %v741 = vmul.f32 %v683, %v735
      %v742 = vmul.f32 %v684, %v735
      %v743 = vmul.f32 %v685, %v735
      %v744 = vmul.f32 %v686, %v735
      %v745 = vmul.f32 %v687, %v735
      %v746 = vmul.f32 %v688, %v735
      %v747 = vmul.f32 %v689, %v735
      %v748 = vmul.f32 %v690, %v735
      %v749 = vmul.f32 %v691, %v735
      %v750 = vmul.f32 %v692, %v735
      %v751 = vmul.f32 %v693, %v735
      %v752 = vadd.f32 %v715, %v736
      %v753 = vadd.f32 %v716, %v737
      %v754 = vadd.f32 %v717, %v738
      %v755 = vadd.f32 %v718, %v739
      %v756 = vadd.f32 %v719, %v740
      %v757 = vadd.f32 %v720, %v741
      %v758 = vadd.f32 %v721, %v742
      %v759 = vadd.f32 %v722, %v743
      %v760 = vadd.f32 %v723, %v744
      %v761 = vadd.f32 %v724, %v745
      %v762 = vadd.f32 %v725, %v746
      %v763 = vadd.f32 %v726, %v747
      %v764 = vadd.f32 %v727, %v748
      %v765 = vadd.f32 %v728, %v749
      %v766 = vadd.f32 %v729, %v750
      %v767 = vadd.f32 %v730, %v751
      %v768 = vld [vmem:[%s3 + $0x2] sm:$0x1]
      %v769 = vlaneseq
      %v770 = vshrl.u32 %v769, 7
      %v771 = vsub.s32 0, %v770
      %v772 = vrot.slane %v768, %v771
      %v773 = vmul.f32 %v694, %v772
      %v774 = vmul.f32 %v695, %v772
      %v775 = vmul.f32 %v696, %v772
      %v776 = vmul.f32 %v697, %v772
      %v777 = vmul.f32 %v698, %v772
      %v778 = vmul.f32 %v699, %v772
      %v779 = vmul.f32 %v700, %v772
      %v780 = vmul.f32 %v701, %v772
      %v781 = vmul.f32 %v702, %v772
      %v782 = vmul.f32 %v703, %v772
      %v783 = vmul.f32 %v704, %v772
      %v784 = vmul.f32 %v705, %v772
      %v785 = vmul.f32 %v706, %v772
      %v786 = vmul.f32 %v707, %v772
      %v787 = vmul.f32 %v708, %v772
      %v788 = vmul.f32 %v709, %v772
      %v789 = vadd.f32 %v752, %v773
      %v790 = vadd.f32 %v753, %v774
      %v791 = vadd.f32 %v754, %v775
      %v792 = vadd.f32 %v755, %v776
      %v793 = vadd.f32 %v756, %v777
      %v794 = vadd.f32 %v757, %v778
      %v795 = vadd.f32 %v758, %v779
      %v796 = vadd.f32 %v759, %v780
      %v797 = vadd.f32 %v760, %v781
      %v798 = vadd.f32 %v761, %v782
      %v799 = vadd.f32 %v762, %v783
      %v800 = vadd.f32 %v763, %v784
      %v801 = vadd.f32 %v764, %v785
      %v802 = vadd.f32 %v765, %v786
      %v803 = vadd.f32 %v766, %v787
      %v804 = vadd.f32 %v767, %v788
      %s805 = scalar_lea.vmem [#allocation2], 32
      %v806 = vld [vmem:[%s805 + $0x7] sm:$0xff]
      %v807 = vld [vmem:[%s805 + $0xf] sm:$0xff]
      %v808 = vld [vmem:[%s805 + $0x27] sm:$0xff]
      %v809 = vld [vmem:[%s805 + $0x2f] sm:$0xff]
      %v810 = vld [vmem:[%s805 + $0x47] sm:$0xff]
      %v811 = vld [vmem:[%s805 + $0x4f] sm:$0xff]
      %v812 = vld [vmem:[%s805 + $0x67] sm:$0xff]
      %v813 = vld [vmem:[%s805 + $0x6f] sm:$0xff]
      %v814 = vld [vmem:[%s805 + $0x87] sm:$0xff]
      %v815 = vld [vmem:[%s805 + $0x8f] sm:$0xff]
      %v816 = vld [vmem:[%s805 + $0xa7] sm:$0xff]
      %v817 = vld [vmem:[%s805 + $0xaf] sm:$0xff]
      %v818 = vld [vmem:[%s805 + $0xc7] sm:$0xff]
      %v819 = vld [vmem:[%s805 + $0xcf] sm:$0xff]
      %v820 = vld [vmem:[%s805 + $0xe7] sm:$0xff]
      %v821 = vld [vmem:[%s805 + $0xef] sm:$0xff]
      %v822 = vld [vmem:[%s805 + $0x8] sm:$0xff]
      %v823 = vld [vmem:[%s805 + $0x10] sm:$0xff]
      %v824 = vld [vmem:[%s805 + $0x28] sm:$0xff]
      %v825 = vld [vmem:[%s805 + $0x30] sm:$0xff]
      %v826 = vld [vmem:[%s805 + $0x48] sm:$0xff]
      %v827 = vld [vmem:[%s805 + $0x50] sm:$0xff]
      %v828 = vld [vmem:[%s805 + $0x68] sm:$0xff]
      %v829 = vld [vmem:[%s805 + $0x70] sm:$0xff]
      %v830 = vld [vmem:[%s805 + $0x88] sm:$0xff]
      %v831 = vld [vmem:[%s805 + $0x90] sm:$0xff]
      %v832 = vld [vmem:[%s805 + $0xa8] sm:$0xff]
      %v833 = vld [vmem:[%s805 + $0xb0] sm:$0xff]
      %v834 = vld [vmem:[%s805 + $0xc8] sm:$0xff]
      %v835 = vld [vmem:[%s805 + $0xd0] sm:$0xff]
      %v836 = vld [vmem:[%s805 + $0xe8] sm:$0xff]
      %v837 = vld [vmem:[%s805 + $0xf0] sm:$0xff]
      %v838 = vld [vmem:[%s805 + $0x9] sm:$0xff]
      %v839 = vld [vmem:[%s805 + $0x11] sm:$0xff]
      %v840 = vld [vmem:[%s805 + $0x29] sm:$0xff]
      %v841 = vld [vmem:[%s805 + $0x31] sm:$0xff]
      %v842 = vld [vmem:[%s805 + $0x49] sm:$0xff]
      %v843 = vld [vmem:[%s805 + $0x51] sm:$0xff]
      %v844 = vld [vmem:[%s805 + $0x69] sm:$0xff]
      %v845 = vld [vmem:[%s805 + $0x71] sm:$0xff]
      %v846 = vld [vmem:[%s805 + $0x89] sm:$0xff]
      %v847 = vld [vmem:[%s805 + $0x91] sm:$0xff]
      %v848 = vld [vmem:[%s805 + $0xa9] sm:$0xff]
      %v849 = vld [vmem:[%s805 + $0xb1] sm:$0xff]
      %v850 = vld [vmem:[%s805 + $0xc9] sm:$0xff]
      %v851 = vld [vmem:[%s805 + $0xd1] sm:$0xff]
      %v852 = vld [vmem:[%s805 + $0xe9] sm:$0xff]
      %v853 = vld [vmem:[%s805 + $0xf1] sm:$0xff]
      %s854 = scalar_lea.vmem %s3, 4
      %v855 = vld [vmem:[%s854] sm:$0x1]
      %v856 = vlaneseq
      %v857 = vshrl.u32 %v856, 7
      %v858 = vsub.s32 0, %v857
      %v859 = vrot.slane %v855, %v858
      %v860 = vmul.f32 %v806, %v859
      %v861 = vmul.f32 %v807, %v859
      %v862 = vmul.f32 %v808, %v859
      %v863 = vmul.f32 %v809, %v859
      %v864 = vmul.f32 %v810, %v859
      %v865 = vmul.f32 %v811, %v859
      %v866 = vmul.f32 %v812, %v859
      %v867 = vmul.f32 %v813, %v859
      %v868 = vmul.f32 %v814, %v859
      %v869 = vmul.f32 %v815, %v859
      %v870 = vmul.f32 %v816, %v859
      %v871 = vmul.f32 %v817, %v859
      %v872 = vmul.f32 %v818, %v859
      %v873 = vmul.f32 %v819, %v859
      %v874 = vmul.f32 %v820, %v859
      %v875 = vmul.f32 %v821, %v859
      %v876 = vadd.f32 %v789, %v860
      %v877 = vadd.f32 %v790, %v861
      %v878 = vadd.f32 %v791, %v862
      %v879 = vadd.f32 %v792, %v863
      %v880 = vadd.f32 %v793, %v864
      %v881 = vadd.f32 %v794, %v865
      %v882 = vadd.f32 %v795, %v866
      %v883 = vadd.f32 %v796, %v867
      %v884 = vadd.f32 %v797, %v868
      %v885 = vadd.f32 %v798, %v869
      %v886 = vadd.f32 %v799, %v870
      %v887 = vadd.f32 %v800, %v871
      %v888 = vadd.f32 %v801, %v872
      %v889 = vadd.f32 %v802, %v873
      %v890 = vadd.f32 %v803, %v874
      %v891 = vadd.f32 %v804, %v875
      %v892 = vld [vmem:[%s854 + $0x1] sm:$0x1]
      %v893 = vlaneseq
      %v894 = vshrl.u32 %v893, 7
      %v895 = vsub.s32 0, %v894
      %v896 = vrot.slane %v892, %v895
      %v897 = vmul.f32 %v822, %v896
      %v898 = vmul.f32 %v823, %v896
      %v899 = vmul.f32 %v824, %v896
      %v900 = vmul.f32 %v825, %v896
      %v901 = vmul.f32 %v826, %v896
      %v902 = vmul.f32 %v827, %v896
      %v903 = vmul.f32 %v828, %v896
      %v904 = vmul.f32 %v829, %v896
      %v905 = vmul.f32 %v830, %v896
      %v906 = vmul.f32 %v831, %v896
      %v907 = vmul.f32 %v832, %v896
      %v908 = vmul.f32 %v833, %v896
      %v909 = vmul.f32 %v834, %v896
      %v910 = vmul.f32 %v835, %v896
      %v911 = vmul.f32 %v836, %v896
      %v912 = vmul.f32 %v837, %v896
      %v913 = vadd.f32 %v876, %v897
      %v914 = vadd.f32 %v877, %v898
      %v915 = vadd.f32 %v878, %v899
      %v916 = vadd.f32 %v879, %v900
      %v917 = vadd.f32 %v880, %v901
      %v918 = vadd.f32 %v881, %v902
      %v919 = vadd.f32 %v882, %v903
      %v920 = vadd.f32 %v883, %v904
      %v921 = vadd.f32 %v884, %v905
      %v922 = vadd.f32 %v885, %v906
      %v923 = vadd.f32 %v886, %v907
      %v924 = vadd.f32 %v887, %v908
      %v925 = vadd.f32 %v888, %v909
      %v926 = vadd.f32 %v889, %v910
      %v927 = vadd.f32 %v890, %v911
      %v928 = vadd.f32 %v891, %v912
      %v929 = vld [vmem:[%s854 + $0x2] sm:$0x1]
      %v930 = vlaneseq
      %v931 = vshrl.u32 %v930, 7
      %v932 = vsub.s32 0, %v931
      %v933 = vrot.slane %v929, %v932
      %v934 = vmul.f32 %v838, %v933
      %v935 = vmul.f32 %v839, %v933
      %v936 = vmul.f32 %v840, %v933
      %v937 = vmul.f32 %v841, %v933
      %v938 = vmul.f32 %v842, %v933
      %v939 = vmul.f32 %v843, %v933
      %v940 = vmul.f32 %v844, %v933
      %v941 = vmul.f32 %v845, %v933
      %v942 = vmul.f32 %v846, %v933
      %v943 = vmul.f32 %v847, %v933
      %v944 = vmul.f32 %v848, %v933
      %v945 = vmul.f32 %v849, %v933
      %v946 = vmul.f32 %v850, %v933
      %v947 = vmul.f32 %v851, %v933
      %v948 = vmul.f32 %v852, %v933
      %v949 = vmul.f32 %v853, %v933
      %v950 = vadd.f32 %v913, %v934
      %v951 = vadd.f32 %v914, %v935
      %v952 = vadd.f32 %v915, %v936
      %v953 = vadd.f32 %v916, %v937
      %v954 = vadd.f32 %v917, %v938
      %v955 = vadd.f32 %v918, %v939
      %v956 = vadd.f32 %v919, %v940
      %v957 = vadd.f32 %v920, %v941
      %v958 = vadd.f32 %v921, %v942
      %v959 = vadd.f32 %v922, %v943
      %v960 = vadd.f32 %v923, %v944
      %v961 = vadd.f32 %v924, %v945
      %v962 = vadd.f32 %v925, %v946
      %v963 = vadd.f32 %v926, %v947
      %v964 = vadd.f32 %v927, %v948
      %v965 = vadd.f32 %v928, %v949
      %s966 = scalar_lea.vmem [#allocation2], 64
      %v967 = vld [vmem:[%s966 + $0x7] sm:$0xff]
      %v968 = vld [vmem:[%s966 + $0xf] sm:$0xff]
      %v969 = vld [vmem:[%s966 + $0x27] sm:$0xff]
      %v970 = vld [vmem:[%s966 + $0x2f] sm:$0xff]
      %v971 = vld [vmem:[%s966 + $0x47] sm:$0xff]
      %v972 = vld [vmem:[%s966 + $0x4f] sm:$0xff]
      %v973 = vld [vmem:[%s966 + $0x67] sm:$0xff]
      %v974 = vld [vmem:[%s966 + $0x6f] sm:$0xff]
      %v975 = vld [vmem:[%s966 + $0x87] sm:$0xff]
      %v976 = vld [vmem:[%s966 + $0x8f] sm:$0xff]
      %v977 = vld [vmem:[%s966 + $0xa7] sm:$0xff]
      %v978 = vld [vmem:[%s966 + $0xaf] sm:$0xff]
      %v979 = vld [vmem:[%s966 + $0xc7] sm:$0xff]
      %v980 = vld [vmem:[%s966 + $0xcf] sm:$0xff]
      %v981 = vld [vmem:[%s966 + $0xe7] sm:$0xff]
      %v982 = vld [vmem:[%s966 + $0xef] sm:$0xff]
      %v983 = vld [vmem:[%s966 + $0x8] sm:$0xff]
      %v984 = vld [vmem:[%s966 + $0x10] sm:$0xff]
      %v985 = vld [vmem:[%s966 + $0x28] sm:$0xff]
      %v986 = vld [vmem:[%s966 + $0x30] sm:$0xff]
      %v987 = vld [vmem:[%s966 + $0x48] sm:$0xff]
      %v988 = vld [vmem:[%s966 + $0x50] sm:$0xff]
      %v989 = vld [vmem:[%s966 + $0x68] sm:$0xff]
      %v990 = vld [vmem:[%s966 + $0x70] sm:$0xff]
      %v991 = vld [vmem:[%s966 + $0x88] sm:$0xff]
      %v992 = vld [vmem:[%s966 + $0x90] sm:$0xff]
      %v993 = vld [vmem:[%s966 + $0xa8] sm:$0xff]
      %v994 = vld [vmem:[%s966 + $0xb0] sm:$0xff]
      %v995 = vld [vmem:[%s966 + $0xc8] sm:$0xff]
      %v996 = vld [vmem:[%s966 + $0xd0] sm:$0xff]
      %v997 = vld [vmem:[%s966 + $0xe8] sm:$0xff]
      %v998 = vld [vmem:[%s966 + $0xf0] sm:$0xff]
      %v999 = vld [vmem:[%s966 + $0x9] sm:$0xff]
      %v1000 = vld [vmem:[%s966 + $0x11] sm:$0xff]
      %v1001 = vld [vmem:[%s966 + $0x29] sm:$0xff]
      %v1002 = vld [vmem:[%s966 + $0x31] sm:$0xff]
      %v1003 = vld [vmem:[%s966 + $0x49] sm:$0xff]
      %v1004 = vld [vmem:[%s966 + $0x51] sm:$0xff]
      %v1005 = vld [vmem:[%s966 + $0x69] sm:$0xff]
      %v1006 = vld [vmem:[%s966 + $0x71] sm:$0xff]
      %v1007 = vld [vmem:[%s966 + $0x89] sm:$0xff]
      %v1008 = vld [vmem:[%s966 + $0x91] sm:$0xff]
      %v1009 = vld [vmem:[%s966 + $0xa9] sm:$0xff]
      %v1010 = vld [vmem:[%s966 + $0xb1] sm:$0xff]
      %v1011 = vld [vmem:[%s966 + $0xc9] sm:$0xff]
      %v1012 = vld [vmem:[%s966 + $0xd1] sm:$0xff]
      %v1013 = vld [vmem:[%s966 + $0xe9] sm:$0xff]
      %v1014 = vld [vmem:[%s966 + $0xf1] sm:$0xff]
      %s1015 = scalar_lea.vmem %s3, 8
      %v1016 = vld [vmem:[%s1015] sm:$0x1]
      %v1017 = vlaneseq
      %v1018 = vshrl.u32 %v1017, 7
      %v1019 = vsub.s32 0, %v1018
      %v1020 = vrot.slane %v1016, %v1019
      %v1021 = vmul.f32 %v967, %v1020
      %v1022 = vmul.f32 %v968, %v1020
      %v1023 = vmul.f32 %v969, %v1020
      %v1024 = vmul.f32 %v970, %v1020
      %v1025 = vmul.f32 %v971, %v1020
      %v1026 = vmul.f32 %v972, %v1020
      %v1027 = vmul.f32 %v973, %v1020
      %v1028 = vmul.f32 %v974, %v1020
      %v1029 = vmul.f32 %v975, %v1020
      %v1030 = vmul.f32 %v976, %v1020
      %v1031 = vmul.f32 %v977, %v1020
      %v1032 = vmul.f32 %v978, %v1020
      %v1033 = vmul.f32 %v979, %v1020
      %v1034 = vmul.f32 %v980, %v1020
      %v1035 = vmul.f32 %v981, %v1020
      %v1036 = vmul.f32 %v982, %v1020
      %v1037 = vadd.f32 %v950, %v1021
      %v1038 = vadd.f32 %v951, %v1022
      %v1039 = vadd.f32 %v952, %v1023
      %v1040 = vadd.f32 %v953, %v1024
      %v1041 = vadd.f32 %v954, %v1025
      %v1042 = vadd.f32 %v955, %v1026
      %v1043 = vadd.f32 %v956, %v1027
      %v1044 = vadd.f32 %v957, %v1028
      %v1045 = vadd.f32 %v958, %v1029
      %v1046 = vadd.f32 %v959, %v1030
      %v1047 = vadd.f32 %v960, %v1031
      %v1048 = vadd.f32 %v961, %v1032
      %v1049 = vadd.f32 %v962, %v1033
      %v1050 = vadd.f32 %v963, %v1034
      %v1051 = vadd.f32 %v964, %v1035
      %v1052 = vadd.f32 %v965, %v1036
      %v1053 = vld [vmem:[%s1015 + $0x1] sm:$0x1]
      %v1054 = vlaneseq
      %v1055 = vshrl.u32 %v1054, 7
      %v1056 = vsub.s32 0, %v1055
      %v1057 = vrot.slane %v1053, %v1056
      %v1058 = vmul.f32 %v983, %v1057
      %v1059 = vmul.f32 %v984, %v1057
      %v1060 = vmul.f32 %v985, %v1057
      %v1061 = vmul.f32 %v986, %v1057
      %v1062 = vmul.f32 %v987, %v1057
      %v1063 = vmul.f32 %v988, %v1057
      %v1064 = vmul.f32 %v989, %v1057
      %v1065 = vmul.f32 %v990, %v1057
      %v1066 = vmul.f32 %v991, %v1057
      %v1067 = vmul.f32 %v992, %v1057
      %v1068 = vmul.f32 %v993, %v1057
      %v1069 = vmul.f32 %v994, %v1057
      %v1070 = vmul.f32 %v995, %v1057
      %v1071 = vmul.f32 %v996, %v1057
      %v1072 = vmul.f32 %v997, %v1057
      %v1073 = vmul.f32 %v998, %v1057
      %v1074 = vadd.f32 %v1037, %v1058
      %v1075 = vadd.f32 %v1038, %v1059
      %v1076 = vadd.f32 %v1039, %v1060
      %v1077 = vadd.f32 %v1040, %v1061
      %v1078 = vadd.f32 %v1041, %v1062
      %v1079 = vadd.f32 %v1042, %v1063
      %v1080 = vadd.f32 %v1043, %v1064
      %v1081 = vadd.f32 %v1044, %v1065
      %v1082 = vadd.f32 %v1045, %v1066
      %v1083 = vadd.f32 %v1046, %v1067
      %v1084 = vadd.f32 %v1047, %v1068
      %v1085 = vadd.f32 %v1048, %v1069
      %v1086 = vadd.f32 %v1049, %v1070
      %v1087 = vadd.f32 %v1050, %v1071
      %v1088 = vadd.f32 %v1051, %v1072
      %v1089 = vadd.f32 %v1052, %v1073
      %v1090 = vld [vmem:[%s1015 + $0x2] sm:$0x1]
      %v1091 = vlaneseq
      %v1092 = vshrl.u32 %v1091, 7
      %v1093 = vsub.s32 0, %v1092
      %v1094 = vrot.slane %v1090, %v1093
      %v1095 = vmul.f32 %v999, %v1094
      %v1096 = vmul.f32 %v1000, %v1094
      %v1097 = vmul.f32 %v1001, %v1094
      %v1098 = vmul.f32 %v1002, %v1094
      %v1099 = vmul.f32 %v1003, %v1094
      %v1100 = vmul.f32 %v1004, %v1094
      %v1101 = vmul.f32 %v1005, %v1094
      %v1102 = vmul.f32 %v1006, %v1094
      %v1103 = vmul.f32 %v1007, %v1094
      %v1104 = vmul.f32 %v1008, %v1094
      %v1105 = vmul.f32 %v1009, %v1094
      %v1106 = vmul.f32 %v1010, %v1094
      %v1107 = vmul.f32 %v1011, %v1094
      %v1108 = vmul.f32 %v1012, %v1094
      %v1109 = vmul.f32 %v1013, %v1094
      %v1110 = vmul.f32 %v1014, %v1094
      %v1111 = vadd.f32 %v1074, %v1095
      %v1112 = vadd.f32 %v1075, %v1096
      %v1113 = vadd.f32 %v1076, %v1097
      %v1114 = vadd.f32 %v1077, %v1098
      %v1115 = vadd.f32 %v1078, %v1099
      %v1116 = vadd.f32 %v1079, %v1100
      %v1117 = vadd.f32 %v1080, %v1101
      %v1118 = vadd.f32 %v1081, %v1102
      %v1119 = vadd.f32 %v1082, %v1103
      %v1120 = vadd.f32 %v1083, %v1104
      %v1121 = vadd.f32 %v1084, %v1105
      %v1122 = vadd.f32 %v1085, %v1106
      %v1123 = vadd.f32 %v1086, %v1107
      %v1124 = vadd.f32 %v1087, %v1108
      %v1125 = vadd.f32 %v1088, %v1109
      %v1126 = vadd.f32 %v1089, %v1110
      %v1127 = vld [vmem:[%s4] sm:$0x1]
      %v1129 = vlaneseq
      %v1130 = vshrl.u32 %v1129, 7
      %v1131 = vsub.s32 0, %v1130
      %v1132 = vrot.slane %v1127, %v1131
      %v1134 = vadd.f32 %v1111, %v1132
      %v1135 = vadd.f32 %v1112, %v1132
      %v1136 = vadd.f32 %v1113, %v1132
      %v1137 = vadd.f32 %v1114, %v1132
      %v1138 = vadd.f32 %v1115, %v1132
      %v1139 = vadd.f32 %v1116, %v1132
      %v1140 = vadd.f32 %v1117, %v1132
      %v1141 = vadd.f32 %v1118, %v1132
      %v1142 = vadd.f32 %v1119, %v1132
      %v1143 = vadd.f32 %v1120, %v1132
      %v1144 = vadd.f32 %v1121, %v1132
      %v1145 = vadd.f32 %v1122, %v1132
      %v1146 = vadd.f32 %v1123, %v1132
      %v1147 = vadd.f32 %v1124, %v1132
      %v1148 = vadd.f32 %v1125, %v1132
      %v1149 = vadd.f32 %v1126, %v1132
      %v1150 = vmax.f32 %v1134, 0.0
      %v1151 = vmax.f32 %v1135, 0.0
      %v1152 = vmax.f32 %v1136, 0.0
      %v1153 = vmax.f32 %v1137, 0.0
      %v1154 = vmax.f32 %v1138, 0.0
      %v1155 = vmax.f32 %v1139, 0.0
      %v1156 = vmax.f32 %v1140, 0.0
      %v1157 = vmax.f32 %v1141, 0.0
      %v1158 = vmax.f32 %v1142, 0.0
      %v1159 = vmax.f32 %v1143, 0.0
      %v1160 = vmax.f32 %v1144, 0.0
      %v1161 = vmax.f32 %v1145, 0.0
      %v1162 = vmax.f32 %v1146, 0.0
      %v1163 = vmax.f32 %v1147, 0.0
      %v1164 = vmax.f32 %v1148, 0.0
      %v1165 = vmax.f32 %v1149, 0.0
      %v1166 = vmin.f32 %v1150, 6.0
      %v1167 = vmin.f32 %v1151, 6.0
      %v1168 = vmin.f32 %v1152, 6.0
      %v1169 = vmin.f32 %v1153, 6.0
      %v1170 = vmin.f32 %v1154, 6.0
      %v1171 = vmin.f32 %v1155, 6.0
      %v1172 = vmin.f32 %v1156, 6.0
      %v1173 = vmin.f32 %v1157, 6.0
      %v1174 = vmin.f32 %v1158, 6.0
      %v1175 = vmin.f32 %v1159, 6.0
      %v1176 = vmin.f32 %v1160, 6.0
      %v1177 = vmin.f32 %v1161, 6.0
      %v1178 = vmin.f32 %v1162, 6.0
      %v1179 = vmin.f32 %v1163, 6.0
      %v1180 = vmin.f32 %v1164, 6.0
      %v1181 = vmin.f32 %v1165, 6.0
      %v1182 = vld [vmem:[%s5] sm:$0xff]
      %v1183 = vld [vmem:[%s5 + $0x8] sm:$0xff]
      %v1184 = vld [vmem:[%s5 + $0x10] sm:$0xff]
      %v1185 = vld [vmem:[%s5 + $0x18] sm:$0xff]
      %v1186 = vld [vmem:[%s5 + $0x20] sm:$0xff]
      %v1187 = vld [vmem:[%s5 + $0x28] sm:$0xff]
      %v1188 = vld [vmem:[%s5 + $0x30] sm:$0xff]
      %v1189 = vld [vmem:[%s5 + $0x38] sm:$0xff]
      %v1190 = vld [vmem:[%s5 + $0x40] sm:$0xff]
      %v1191 = vld [vmem:[%s5 + $0x48] sm:$0xff]
      %v1192 = vld [vmem:[%s5 + $0x50] sm:$0xff]
      %v1193 = vld [vmem:[%s5 + $0x58] sm:$0xff]
      %v1194 = vld [vmem:[%s5 + $0x60] sm:$0xff]
      %v1195 = vld [vmem:[%s5 + $0x68] sm:$0xff]
      %v1196 = vld [vmem:[%s5 + $0x70] sm:$0xff]
      %v1197 = vld [vmem:[%s5 + $0x78] sm:$0xff]
      %v1198 = vld [vmem:[%s6] sm:$0x1]
      %v1200 = vlaneseq
      %v1201 = vshrl.u32 %v1200, 7
      %v1202 = vsub.s32 0, %v1201
      %v1203 = vrot.slane %v1198, %v1202
      %1205 = vmatprep.subr.mxu0 0.0
      %1206 = vmatpush1.msra.mxu0 %v1182
      %1207 = vmatprep.subr.mxu0 0.0
      %1208 = vmatpush1.msra.mxu0 %v1183
      %1209 = vmatprep.subr.mxu0 0.0
      %1210 = vmatpush1.msra.mxu0 %v1184
      %1211 = vmatprep.subr.mxu0 0.0
      %1212 = vmatpush1.msra.mxu0 %v1185
      %1213 = vmatprep.subr.mxu0 0.0
      %1214 = vmatpush1.msra.mxu0 %v1186
      %1215 = vmatprep.subr.mxu0 0.0
      %1216 = vmatpush1.msra.mxu0 %v1187
      %1217 = vmatprep.subr.mxu0 0.0
      %1218 = vmatpush1.msra.mxu0 %v1188
      %1219 = vmatprep.subr.mxu0 0.0
      %1220 = vmatpush1.msra.mxu0 %v1189
      %1221 = vmatprep.subr.mxu0 0.0
      %1222 = vmatpush1.msra.mxu0 %v1190
      %1223 = vmatprep.subr.mxu0 0.0
      %1224 = vmatpush1.msra.mxu0 %v1191
      %1225 = vmatprep.subr.mxu0 0.0
      %1226 = vmatpush1.msra.mxu0 %v1192
      %1227 = vmatprep.subr.mxu0 0.0
      %1228 = vmatpush1.msra.mxu0 %v1193
      %1229 = vmatprep.subr.mxu0 0.0
      %1230 = vmatpush1.msra.mxu0 %v1194
      %1231 = vmatprep.subr.mxu0 0.0
      %1232 = vmatpush1.msra.mxu0 %v1195
      %1233 = vmatprep.subr.mxu0 0.0
      %1234 = vmatpush1.msra.mxu0 %v1196
      %1235 = vmatprep.subr.mxu0 0.0
      %1236 = vmatpush1.msra.mxu0 %v1197
      %1237 = vmatprep.subr.mxu0 0.0
      %1238 = vmatpush1.msra.mxu0 0.0
      %1239 = vmatprep.subr.mxu0 0.0
      %1240 = vmatpush1.msra.mxu0 0.0
      %1241 = vmatprep.subr.mxu0 0.0
      %1242 = vmatpush1.msra.mxu0 0.0
      %1243 = vmatprep.subr.mxu0 0.0
      %1244 = vmatpush1.msra.mxu0 0.0
      %1245 = vmatprep.subr.mxu0 0.0
      %1246 = vmatpush1.msra.mxu0 0.0
      %1247 = vmatprep.subr.mxu0 0.0
      %1248 = vmatpush1.msra.mxu0 0.0
      %1249 = vmatprep.subr.mxu0 0.0
      %1250 = vmatpush1.msra.mxu0 0.0
      %1251 = vmatprep.subr.mxu0 0.0
      %1252 = vmatpush1.msra.mxu0 0.0
      %1253 = vmatprep.subr.mxu0 0.0
      %1254 = vmatpush1.msra.mxu0 0.0
      %1255 = vmatprep.subr.mxu0 0.0
      %1256 = vmatpush1.msra.mxu0 0.0
      %1257 = vmatprep.subr.mxu0 0.0
      %1258 = vmatpush1.msra.mxu0 0.0
      %1259 = vmatprep.subr.mxu0 0.0
      %1260 = vmatpush1.msra.mxu0 0.0
      %1261 = vmatprep.subr.mxu0 0.0
      %1262 = vmatpush1.msra.mxu0 0.0
      %1263 = vmatprep.subr.mxu0 0.0
      %1264 = vmatpush1.msra.mxu0 0.0
      %1265 = vmatprep.subr.mxu0 0.0
      %1266 = vmatpush1.msra.mxu0 0.0
      %1267 = vmatprep.subr.mxu0 0.0
      %1268 = vmatpush1.msra.mxu0 0.0
      %1269 = vmatprep.mubr.f32.mxu0 0.0
      %1270 = vmatmul.mubr.f32.gmra.mrb[0].mxu0 %v1166
      %v1271 = vpop.f32.mrb[0].mxu0
      %v1272 = vadd.f32 %v1203, %v1271
      %v1273 = vpop.f32.mrb[0].mxu0
      %1274 = vmatprep.mubr.f32.mxu0 0.0
      %1275 = vmatmul.mubr.f32.gmra.mrb[0].mxu0 %v1167
      %v1276 = vpop.f32.mrb[0].mxu0
      %v1277 = vadd.f32 %v1203, %v1276
      %v1278 = vpop.f32.mrb[0].mxu0
      %1279 = vmatprep.mubr.f32.mxu0 0.0
      %1280 = vmatmul.mubr.f32.gmra.mrb[0].mxu0 %v1168
      %v1281 = vpop.f32.mrb[0].mxu0
      %v1282 = vadd.f32 %v1203, %v1281
      %v1283 = vpop.f32.mrb[0].mxu0
      %1284 = vmatprep.mubr.f32.mxu0 0.0
      %1285 = vmatmul.mubr.f32.gmra.mrb[0].mxu0 %v1169
      %v1286 = vpop.f32.mrb[0].mxu0
      %v1287 = vadd.f32 %v1203, %v1286
      %v1288 = vpop.f32.mrb[0].mxu0
      %1289 = vmatprep.mubr.f32.mxu0 0.0
      %1290 = vmatmul.mubr.f32.gmra.mrb[0].mxu0 %v1170
      %v1291 = vpop.f32.mrb[0].mxu0
      %v1292 = vadd.f32 %v1203, %v1291
      %v1293 = vpop.f32.mrb[0].mxu0
      %1294 = vmatprep.mubr.f32.mxu0 0.0
      %1295 = vmatmul.mubr.f32.gmra.mrb[0].mxu0 %v1171
      %v1296 = vpop.f32.mrb[0].mxu0
      %v1297 = vadd.f32 %v1203, %v1296
      %v1298 = vpop.f32.mrb[0].mxu0
      %1299 = vmatprep.mubr.f32.mxu0 0.0
      %1300 = vmatmul.mubr.f32.gmra.mrb[0].mxu0 %v1172
      %v1301 = vpop.f32.mrb[0].mxu0
      %v1302 = vadd.f32 %v1203, %v1301
      %v1303 = vpop.f32.mrb[0].mxu0
      %1304 = vmatprep.mubr.f32.mxu0 0.0
      %1305 = vmatmul.mubr.f32.gmra.mrb[0].mxu0 %v1173
      %v1306 = vpop.f32.mrb[0].mxu0
      %v1307 = vadd.f32 %v1203, %v1306
      %v1308 = vpop.f32.mrb[0].mxu0
      %1309 = vmatprep.mubr.f32.mxu0 0.0
      %1310 = vmatmul.mubr.f32.gmra.mrb[0].mxu0 %v1174
      %v1311 = vpop.f32.mrb[0].mxu0
      %v1312 = vadd.f32 %v1203, %v1311
      %v1313 = vpop.f32.mrb[0].mxu0
      %1314 = vmatprep.mubr.f32.mxu0 0.0
      %1315 = vmatmul.mubr.f32.gmra.mrb[0].mxu0 %v1175
      %v1316 = vpop.f32.mrb[0].mxu0
      %v1317 = vadd.f32 %v1203, %v1316
      %v1318 = vpop.f32.mrb[0].mxu0
      %1319 = vmatprep.mubr.f32.mxu0 0.0
      %1320 = vmatmul.mubr.f32.gmra.mrb[0].mxu0 %v1176
      %v1321 = vpop.f32.mrb[0].mxu0
      %v1322 = vadd.f32 %v1203, %v1321
      %v1323 = vpop.f32.mrb[0].mxu0
      %1324 = vmatprep.mubr.f32.mxu0 0.0
      %1325 = vmatmul.mubr.f32.gmra.mrb[0].mxu0 %v1177
      %v1326 = vpop.f32.mrb[0].mxu0
      %v1327 = vadd.f32 %v1203, %v1326
      %v1328 = vpop.f32.mrb[0].mxu0
      %1329 = vmatprep.mubr.f32.mxu0 0.0
      %1330 = vmatmul.mubr.f32.gmra.mrb[0].mxu0 %v1178
      %v1331 = vpop.f32.mrb[0].mxu0
      %v1332 = vadd.f32 %v1203, %v1331
      %v1333 = vpop.f32.mrb[0].mxu0
      %1334 = vmatprep.mubr.f32.mxu0 0.0
      %1335 = vmatmul.mubr.f32.gmra.mrb[0].mxu0 %v1179
      %v1336 = vpop.f32.mrb[0].mxu0
      %v1337 = vadd.f32 %v1203, %v1336
      %v1338 = vpop.f32.mrb[0].mxu0
      %1339 = vmatprep.mubr.f32.mxu0 0.0
      %1340 = vmatmul.mubr.f32.gmra.mrb[0].mxu0 %v1180
      %v1341 = vpop.f32.mrb[0].mxu0
      %v1342 = vadd.f32 %v1203, %v1341
      %v1343 = vpop.f32.mrb[0].mxu0
      %1344 = vmatprep.mubr.f32.mxu0 0.0
      %1345 = vmatmul.mubr.f32.gmra.mrb[0].mxu0 %v1181
      %v1346 = vpop.f32.mrb[0].mxu0
      %v1347 = vadd.f32 %v1203, %v1346
      %v1348 = vpop.f32.mrb[0].mxu0
      %1349 = vdwg.mxu0
      %s1350 = sadd.s32 %s324, 1
      %s1351 = smul.u32 %s1350, 16
      %s1352 = scalar_lea.vmem %s292, %s1351
      %v1353 = vld [vmem:[%s1352] sm:$0xff]
      %v1354 = vld [vmem:[%s1352 + $0x8] sm:$0xff]
      %v1355 = vld [vmem:[%s1352 + $0x10] sm:$0xff]
      %v1356 = vld [vmem:[%s1352 + $0x18] sm:$0xff]
      %v1357 = vld [vmem:[%s1352 + $0x20] sm:$0xff]
      %v1358 = vld [vmem:[%s1352 + $0x28] sm:$0xff]
      %v1359 = vld [vmem:[%s1352 + $0x30] sm:$0xff]
      %v1360 = vld [vmem:[%s1352 + $0x38] sm:$0xff]
      %v1361 = vld [vmem:[%s1352 + $0x40] sm:$0xff]
      %v1362 = vld [vmem:[%s1352 + $0x48] sm:$0xff]
      %v1363 = vld [vmem:[%s1352 + $0x50] sm:$0xff]
      %v1364 = vld [vmem:[%s1352 + $0x58] sm:$0xff]
      %v1365 = vld [vmem:[%s1352 + $0x60] sm:$0xff]
      %v1366 = vld [vmem:[%s1352 + $0x68] sm:$0xff]
      %v1367 = vld [vmem:[%s1352 + $0x70] sm:$0xff]
      %v1368 = vld [vmem:[%s1352 + $0x78] sm:$0xff]
      %v1369 = vadd.f32 %v1272, %v1353
      %v1370 = vadd.f32 %v1277, %v1354
      %v1371 = vadd.f32 %v1282, %v1355
      %v1372 = vadd.f32 %v1287, %v1356
      %v1373 = vadd.f32 %v1292, %v1357
      %v1374 = vadd.f32 %v1297, %v1358
      %v1375 = vadd.f32 %v1302, %v1359
      %v1376 = vadd.f32 %v1307, %v1360
      %v1377 = vadd.f32 %v1312, %v1361
      %v1378 = vadd.f32 %v1317, %v1362
      %v1379 = vadd.f32 %v1322, %v1363
      %v1380 = vadd.f32 %v1327, %v1364
      %v1381 = vadd.f32 %v1332, %v1365
      %v1382 = vadd.f32 %v1337, %v1366
      %v1383 = vadd.f32 %v1342, %v1367
      %v1384 = vadd.f32 %v1347, %v1368
      %1385 = vst.msk [vmem:[%s302] sm:$0xff] %vm355, %v1369
      %1386 = vst.msk [vmem:[%s302 + $0x8] sm:$0xff] %vm355, %v1370
      %1387 = vst.msk [vmem:[%s302 + $0x10] sm:$0xff] %vm355, %v1371
      %1388 = vst.msk [vmem:[%s302 + $0x18] sm:$0xff] %vm355, %v1372
      %1389 = vst.msk [vmem:[%s302 + $0x20] sm:$0xff] %vm355, %v1373
      %1390 = vst.msk [vmem:[%s302 + $0x28] sm:$0xff] %vm355, %v1374
      %1391 = vst.msk [vmem:[%s302 + $0x30] sm:$0xff] %vm355, %v1375
      %1392 = vst.msk [vmem:[%s302 + $0x38] sm:$0xff] %vm355, %v1376
      %1393 = vst.msk [vmem:[%s302 + $0x40] sm:$0xff] %vm355, %v1377
      %1394 = vst.msk [vmem:[%s302 + $0x48] sm:$0xff] %vm355, %v1378
      %1395 = vst.msk [vmem:[%s302 + $0x50] sm:$0xff] %vm355, %v1379
      %1396 = vst.msk [vmem:[%s302 + $0x58] sm:$0xff] %vm355, %v1380
      %1397 = vst.msk [vmem:[%s302 + $0x60] sm:$0xff] %vm355, %v1381
      %1398 = vst.msk [vmem:[%s302 + $0x68] sm:$0xff] %vm355, %v1382
      %1399 = vst.msk [vmem:[%s302 + $0x70] sm:$0xff] %vm355, %v1383
      %1400 = vst.msk [vmem:[%s302 + $0x78] sm:$0xff] %vm355, %v1384
      %s1401 = smul.u32 8, %s23
      %p1402 = scmp.lt.s32.totalorder %s22, 1
      %s1403 = scalar_select %p1402, %s22, 1
      %p1404 = scmp.lt.s32.totalorder %s1401, 15
      %s1405 = scalar_select %p1404, %s1401, 15
      %s1406 = smul.addr %s1405, 2
      %s1407 = smul.addr %s1403, 32
      %s1408 = sadd.s32 %s1406, %s1407
      %s1409 = smul.addr %s1408, 8
      %s1410 = scalar_lea.vmem %s7, %s1409
      // Predicated region
      $region57: #{tpu_custom_call.1} parent=47 // pred_check
        %p1411 = pneg %p202
      $region58: #{tpu_custom_call.1} parent=47 // pred_check_branch
        %1413 = sbr.rel (%p1411) target = $region60
      $region59: #{tpu_custom_call.1} parent=47 // pred_region
        %s1414 = smul.u32 8, %s23
      $region60: #{tpu_custom_call.1} parent=47 // pred_fallthru
        _
    $region48: #{tpu_custom_call.1} parent=5 // pred_fallthru
      _
    %p1415 = scmp.le.s32.totalorder 2, %s13
    // Predicated region
    $region61: #{tpu_custom_call.1} parent=5 // pred_check
      %p1416 = pneg %p1415
    $region62: #{tpu_custom_call.1} parent=5 // pred_check_branch
      %1418 = sbr.rel (%p1416) target = $region64
    $region63: #{tpu_custom_call.1} parent=5 // pred_region
      %s1419 = ssub.s32 %s13, 2
      // Predicated region
      $region65: #{tpu_custom_call.1} parent=63 // pred_check
        %p1420 = pneg %p208
      $region66: #{tpu_custom_call.1} parent=63 // pred_check_branch
        %1422 = sbr.rel (%p1420) target = $region68
      $region67: #{tpu_custom_call.1} parent=63 // pred_region
        %s1423 = smul.u32 8, %s25
        %p1424 = scmp.lt.s32.totalorder %s24, 1
        %s1425 = scalar_select %p1424, %s24, 1
        %p1426 = scmp.lt.s32.totalorder %s1423, 15
        %s1427 = scalar_select %p1426, %s1423, 15
        %s1428 = smul.addr %s1427, 2
        %s1429 = smul.addr %s1425, 32
        %s1430 = sadd.s32 %s1428, %s1429
        %s1431 = smul.addr %s1430, 8
        %s1432 = scalar_lea.vmem %s7, %s1431
      $region68: #{tpu_custom_call.1} parent=63 // pred_fallthru
        _
    $region64: #{tpu_custom_call.1} parent=5 // pred_fallthru
      _
  $region6: #{tpu_custom_call.1} parent=0 // loop_footer
    %s17 = sadd.s32 1, %s13
  $region7: #{tpu_custom_call.1} parent=0 // loop_footer_branch
    %12 = sbr.rel target = $region3
  $region8: #{tpu_custom_call.1} parent=0 // loop_exit
    _

</llo_original>
